<compile_context>
chip_gen: v7x
topology: tpu7x:2x2x1
jax: 0.10.0
libtpu: 0.0.40
codegen_flags: <defaults>
</compile_context>

<pallas_src>
import jax
import jax.numpy as jnp
from jax.experimental import pallas as pl
from jax.experimental.pallas import tpu as pltpu

INPUT_DIM = 128      # Frostbite-ram observation size
HIDDEN = 256
ACTION_NUM = 18      # Frostbite-ram-v0 action space
ACTION_PAD = 128     # action dim padded to a full lane width
NEG_INF = -1e30


# --------------------------------------------------------------------------
# kernel
# --------------------------------------------------------------------------
def _actor_rollout_kernel(mem_ref, h0_ref, gum_ref,
                          wih_ref, whh_ref, brz_ref, bin_ref, bhn_ref,
                          w1_ref, b1_ref, w2_ref, b2_ref,
                          stats_ref, hlast_ref,
                          gi_scr, hseq_scr):
    T, B, _ = mem_ref.shape
    H = HIDDEN

    # ---- phase 0: input projection for ALL timesteps in one MXU op --------
    x_all = mem_ref[...].reshape(T * B, INPUT_DIM)                 # bf16
    gi_scr[...] = jnp.dot(x_all, wih_ref[...],
                          preferred_element_type=jnp.float32
                          ).reshape(T, B, 3 * H)

    whh = whh_ref[...]
    b_rz = brz_ref[...]
    b_in = bin_ref[...]
    b_hn = bhn_ref[...]

    # ---- phase 1: serial GRU recurrence (PyTorch gate order r, z, n) ------
    # Only h @ W_hh + gate VPU/EUP math sits on the critical path.
    def gru_step(t, h):
        gi = gi_scr[t]                                             # (B, 3H) f32
        gh = jnp.dot(h.astype(jnp.bfloat16), whh,
                     preferred_element_type=jnp.float32)
        rz = jax.nn.sigmoid(gi[:, :2 * H] + gh[:, :2 * H] + b_rz)  # folded bias
        r = rz[:, :H]
        z = rz[:, H:]
        n = jnp.tanh(gi[:, 2 * H:] + b_in + r * (gh[:, 2 * H:] + b_hn))
        h_new = (1.0 - z) * n + z * h
        hseq_scr[t] = h_new
        return h_new

    if T <= 8:                       # short fixed rollout: static full unroll
        h = h0_ref[...]
        for t in range(T):
            h = gru_step(t, h)
    else:                            # long rollout: in-kernel loop
        h = jax.lax.fori_loop(0, T, gru_step, h0_ref[...])
    hlast_ref[...] = h               # written once, after the recurrence

    # ---- phase 2: batched MLP head + softmax + sampling over T*B rows -----
    a = jnp.maximum(hseq_scr[...].reshape(T * B, H), 0.0).astype(jnp.bfloat16)
    a = jnp.dot(a, w1_ref[...], preferred_element_type=jnp.float32) + b1_ref[...]
    a = jnp.maximum(a, 0.0).astype(jnp.bfloat16)
    logits = jnp.dot(a, w2_ref[...], preferred_element_type=jnp.float32) + b2_ref[...]

    col = jax.lax.broadcasted_iota(jnp.int32, logits.shape, 1)
    valid = col < ACTION_NUM
    logits = jnp.where(valid, logits, NEG_INF)
    m = jnp.max(logits, axis=-1, keepdims=True)
    e = jnp.exp(logits - m)
    s = jnp.sum(e, axis=-1, keepdims=True)
    p = e / s
    logp = (logits - m) - jnp.log(s)
    ent = -jnp.sum(jnp.where(valid, p * logp, 0.0), axis=-1, keepdims=True)

    # Categorical sample via Gumbel-max (noise supplied by the wrapper)
    gum = gum_ref[...].reshape(T * B, ACTION_PAD)
    y = jnp.where(valid, logp + gum, NEG_INF)
    ymax = jnp.max(y, axis=-1, keepdims=True)
    act = jnp.min(jnp.where(y == ymax, col, ACTION_PAD), axis=-1, keepdims=True)
    logp_act = jnp.sum(jnp.where(col == act, logp, 0.0), axis=-1, keepdims=True)

    # pack (act, log_prob, entropy) into one lane-dense slab (unmasked vst)
    stats = jnp.where(col == 0, act.astype(jnp.float32),
                      jnp.where(col == 1, logp_act,
                                jnp.where(col == 2, ent, 0.0)))
    stats_ref[...] = stats.reshape(T, B, ACTION_PAD)


# --------------------------------------------------------------------------
# parameters
# --------------------------------------------------------------------------
def init_params(key):
    """PyTorch-layout parameters with the default uniform(-k, k) init."""
    ks = jax.random.split(key, 8)
    k = 1.0 / jnp.sqrt(HIDDEN)
    return dict(
        w_ih=jax.random.uniform(ks[0], (3 * HIDDEN, INPUT_DIM), jnp.float32, -k, k),
        w_hh=jax.random.uniform(ks[1], (3 * HIDDEN, HIDDEN), jnp.float32, -k, k),
        b_ih=jax.random.uniform(ks[2], (3 * HIDDEN,), jnp.float32, -k, k),
        b_hh=jax.random.uniform(ks[3], (3 * HIDDEN,), jnp.float32, -k, k),
        w1=jax.random.uniform(ks[4], (HIDDEN, HIDDEN), jnp.float32, -k, k),
        b1=jax.random.uniform(ks[5], (HIDDEN,), jnp.float32, -k, k),
        w2=jax.random.uniform(ks[6], (ACTION_NUM, HIDDEN), jnp.float32, -k, k),
        b2=jax.random.uniform(ks[7], (ACTION_NUM,), jnp.float32, -k, k))


def prepare_params(p):
    """One-time glue: transpose to (in,out), pad action dim to 128 lanes,
    fold the r/z gate biases, cast matmul weights to bf16."""
    H = HIDDEN
    w2_t = jnp.zeros((H, ACTION_PAD), jnp.float32).at[:, :ACTION_NUM].set(p['w2'].T)
    b2_p = jnp.zeros((1, ACTION_PAD), jnp.float32).at[:, :ACTION_NUM].set(p['b2'][None, :])
    return dict(
        wih=p['w_ih'].T.astype(jnp.bfloat16),                     # (128, 768)
        whh=p['w_hh'].T.astype(jnp.bfloat16),                     # (256, 768)
        b_rz=(p['b_ih'][:2 * H] + p['b_hh'][:2 * H])[None, :],    # (1, 512) f32
        b_in=p['b_ih'][2 * H:][None, :],                          # (1, 256) f32
        b_hn=p['b_hh'][2 * H:][None, :],                          # (1, 256) f32
        w1=p['w1'].T.astype(jnp.bfloat16),                        # (256, 256)
        b1=p['b1'][None, :],                                      # (1, 256) f32
        w2=w2_t.astype(jnp.bfloat16),                             # (256, 128)
        b2=b2_p)                                                  # (1, 128) f32


# --------------------------------------------------------------------------
# wrappers
# --------------------------------------------------------------------------
def _rollout_call(prep, mem_bf16, h0, gumbel):
    T, B, _ = mem_bf16.shape
    vmem = pl.BlockSpec(memory_space=pltpu.MemorySpace.VMEM)
    return pl.pallas_call(
        _actor_rollout_kernel,
        out_shape=(jax.ShapeDtypeStruct((T, B, ACTION_PAD), jnp.float32),
                   jax.ShapeDtypeStruct((B, HIDDEN), jnp.float32)),
        in_specs=[vmem] * 12,
        out_specs=(vmem, vmem),
        scratch_shapes=[pltpu.VMEM((T, B, 3 * HIDDEN), jnp.float32),  # gi_all
                        pltpu.VMEM((T, B, HIDDEN), jnp.float32)],     # h_t trace
    )(mem_bf16, h0, gumbel,
      prep['wih'], prep['whh'], prep['b_rz'], prep['b_in'], prep['b_hn'],
      prep['w1'], prep['b1'], prep['w2'], prep['b2'])


@jax.jit
def recurrent_actor_rollout(prep, mem_seq, hidden, key):
    """T fused recurrent steps.  mem_seq: (T,B,128) f32; hidden: (B,1,256);
    key: jax PRNG key.  Returns (act (T,B) i32, log_prob, entropy, hidden (1,B,256))."""
    T, B, _ = mem_seq.shape
    h0 = jnp.transpose(hidden, (1, 0, 2))[0]                       # (B, 256)
    gumbel = jax.random.gumbel(key, (T, B, ACTION_PAD), jnp.float32)
    stats, h_last = _rollout_call(prep, mem_seq.astype(jnp.bfloat16), h0, gumbel)
    act = stats[:, :, 0].astype(jnp.int32)
    return act, stats[:, :, 1], stats[:, :, 2], h_last[None, :, :]


@jax.jit
def recurrent_actor_forward(prep, mem, hidden, key):
    """Single step, matching RecurrentActor.forward (action=None path).
    mem: (B,128) f32; hidden: (B,1,256) f32."""
    # TODO(synk): optional `action=` override (evaluate log_prob of a given
    # action) is not implemented; only the sampling path is.
    act, logp, ent, h = recurrent_actor_rollout(prep, mem[None], hidden, key)
    return act[0], logp[0], ent[0], h


# --------------------------------------------------------------------------
# pure-JAX f32 reference (for correctness check)
# --------------------------------------------------------------------------
def reference_rollout(raw, mem_seq, hidden):
    H = HIDDEN
    h = jnp.transpose(hidden, (1, 0, 2))[0]
    ents = []
    for t in range(mem_seq.shape[0]):
        x = mem_seq[t]
        gi = x @ raw['w_ih'].T + raw['b_ih']
        gh = h @ raw['w_hh'].T + raw['b_hh']
        r = jax.nn.sigmoid(gi[:, :H] + gh[:, :H])
        z = jax.nn.sigmoid(gi[:, H:2 * H] + gh[:, H:2 * H])
        n = jnp.tanh(gi[:, 2 * H:] + r * gh[:, 2 * H:])
        h = (1.0 - z) * n + z * h
        a = jnp.maximum(h, 0.0) @ raw['w1'].T + raw['b1']
        logits = jnp.maximum(a, 0.0) @ raw['w2'].T + raw['b2']
        logits = logits - logits.max(-1, keepdims=True)
        se = jnp.exp(logits).sum(-1, keepdims=True)
        p = jnp.exp(logits) / se
        logp = logits - jnp.log(se)
        ents.append(-(p * logp).sum(-1))
    return jnp.stack(ents), h


# --------------------------------------------------------------------------
if __name__ == "__main__":
    B, T = 8, 4
    key = jax.random.PRNGKey(0)
    k_param, k_mem, k_hid, k_noise = jax.random.split(key, 4)

    raw = init_params(k_param)
    prep = prepare_params(raw)                           # one-time weight glue

    mem_seq = jax.random.normal(k_mem, (T, B, INPUT_DIM), jnp.float32)
    hidden0 = jax.random.normal(k_hid, (B, 1, HIDDEN), jnp.float32) * 0.1

    # ---- single-step forward (matches the PyTorch module) -----------------
    act, logp, ent, h1 = jax.block_until_ready(
        recurrent_actor_forward(prep, mem_seq[0], hidden0, k_noise))
    assert act.shape == (B,) and act.dtype == jnp.int32
    assert logp.shape == (B,) and ent.shape == (B,) and h1.shape == (1, B, HIDDEN)
    assert bool(jnp.all((act >= 0) & (act < ACTION_NUM)))
    assert bool(jnp.all(jnp.isfinite(logp))) and bool(jnp.all(logp <= 0))
    assert bool(jnp.all(ent > 0))

    # ---- fused T-step rollout ---------------------------------------------
    act_seq, logp_seq, ent_seq, h_T = jax.block_until_ready(
        recurrent_actor_rollout(prep, mem_seq, hidden0, k_noise))
    assert act_seq.shape == (T, B) and logp_seq.shape == (T, B)
    assert ent_seq.shape == (T, B) and h_T.shape == (1, B, HIDDEN)
    assert bool(jnp.all((act_seq >= 0) & (act_seq < ACTION_NUM)))
    assert bool(jnp.all(jnp.isfinite(logp_seq)))
    assert bool(jnp.all(ent_seq > 0))

    # ---- cross-check rollout vs. step-by-step single-step calls -----------
    h = hidden0
    ents = []
    for step in range(T):
        k_step = jax.random.fold_in(k_noise, step)
        _, _, e_t, h_out = recurrent_actor_forward(prep, mem_seq[step], h, k_step)
        ents.append(e_t)
        h = jnp.transpose(h_out, (1, 0, 2))              # (1,B,H) -> (B,1,H)
    ents = jnp.stack(ents)
    assert bool(jnp.allclose(h_T, h_out, atol=2e-3, rtol=2e-3))
    assert bool(jnp.allclose(ent_seq, ents, atol=2e-3, rtol=2e-3))

    # ---- cross-check against pure-JAX f32 reference (bf16 weight tol) -----
    ent_ref, h_ref = reference_rollout(raw, mem_seq, hidden0)
    assert bool(jnp.allclose(ent_seq, ent_ref, atol=5e-2, rtol=5e-2))
    assert bool(jnp.allclose(h_T[0], h_ref, atol=5e-2, rtol=5e-2))

    print("KERNEL_OK")
</pallas_src>

<mosaic_0001>
module attributes {stable_mosaic.version = 11 : i64} {
  func.func @_actor_rollout_kernel(%arg0: memref<1x8x128xbf16, #tpu.memory_space<vmem>>, %arg1: memref<8x256xf32, #tpu.memory_space<vmem>>, %arg2: memref<1x8x128xf32, #tpu.memory_space<vmem>>, %arg3: memref<128x768xbf16, #tpu.memory_space<vmem>>, %arg4: memref<256x768xbf16, #tpu.memory_space<vmem>>, %arg5: memref<1x512xf32, #tpu.memory_space<vmem>>, %arg6: memref<1x256xf32, #tpu.memory_space<vmem>>, %arg7: memref<1x256xf32, #tpu.memory_space<vmem>>, %arg8: memref<256x256xbf16, #tpu.memory_space<vmem>>, %arg9: memref<1x256xf32, #tpu.memory_space<vmem>>, %arg10: memref<256x128xbf16, #tpu.memory_space<vmem>>, %arg11: memref<1x128xf32, #tpu.memory_space<vmem>>, %arg12: memref<1x8x128xf32, #tpu.memory_space<vmem>>, %arg13: memref<8x256xf32, #tpu.memory_space<vmem>>, %arg14: memref<1x8x768xf32, #tpu.memory_space<vmem>>, %arg15: memref<1x8x256xf32, #tpu.memory_space<vmem>>) attributes {dimension_semantics = [], scalar_prefetch = 0 : i64, scratch_operands = 2 : i64, tpu.core_type = #tpu.core_type<tc>} {
    %c0 = arith.constant 0 : index
    %c0_0 = arith.constant 0 : index
    %c0_1 = arith.constant 0 : index
    %0 = vector.load %arg0[%c0, %c0_0, %c0_1] : memref<1x8x128xbf16, #tpu.memory_space<vmem>>, vector<1x8x128xbf16>
    %1 = vector.shape_cast %0 : vector<1x8x128xbf16> to vector<8x128xbf16>
    %c0_2 = arith.constant 0 : index
    %c0_3 = arith.constant 0 : index
    %2 = vector.load %arg3[%c0_2, %c0_3] : memref<128x768xbf16, #tpu.memory_space<vmem>>, vector<128x768xbf16>
    %cst = arith.constant dense<0.000000e+00> : vector<8x768xf32>
    %3 = tpu.matmul %1, %2, %cst {dimension_numbers = #tpu.dot_dimension_numbers<[1], [0], [0], [1], [0, 0, 1, 1], [], []>} : vector<8x128xbf16>, vector<128x768xbf16>, vector<8x768xf32> -> vector<8x768xf32>
    %4 = vector.shape_cast %3 : vector<8x768xf32> to vector<1x8x768xf32>
    %c0_4 = arith.constant 0 : index
    %c0_5 = arith.constant 0 : index
    %c0_6 = arith.constant 0 : index
    %5 = vector.load %arg14[%c0_4, %c0_5, %c0_6] : memref<1x8x768xf32, #tpu.memory_space<vmem>>, vector<1x8x768xf32>
    tpu.vector_store %arg14[%c0_4, %c0_5, %c0_6], %4 {strides = array<i32>} : memref<1x8x768xf32, #tpu.memory_space<vmem>>, vector<1x8x768xf32>,
    %c0_7 = arith.constant 0 : index
    %c0_8 = arith.constant 0 : index
    %6 = vector.load %arg4[%c0_7, %c0_8] : memref<256x768xbf16, #tpu.memory_space<vmem>>, vector<256x768xbf16>
    %c0_9 = arith.constant 0 : index
    %c0_10 = arith.constant 0 : index
    %7 = vector.load %arg5[%c0_9, %c0_10] : memref<1x512xf32, #tpu.memory_space<vmem>>, vector<1x512xf32>
    %c0_11 = arith.constant 0 : index
    %c0_12 = arith.constant 0 : index
    %8 = vector.load %arg6[%c0_11, %c0_12] : memref<1x256xf32, #tpu.memory_space<vmem>>, vector<1x256xf32>
    %c0_13 = arith.constant 0 : index
    %c0_14 = arith.constant 0 : index
    %9 = vector.load %arg7[%c0_13, %c0_14] : memref<1x256xf32, #tpu.memory_space<vmem>>, vector<1x256xf32>
    %c0_15 = arith.constant 0 : index
    %c0_16 = arith.constant 0 : index
    %10 = vector.load %arg1[%c0_15, %c0_16] : memref<8x256xf32, #tpu.memory_space<vmem>>, vector<8x256xf32>
    %c0_17 = arith.constant 0 : index
    %c0_18 = arith.constant 0 : index
    %c0_19 = arith.constant 0 : index
    %11 = vector.load %arg14[%c0_17, %c0_18, %c0_19] : memref<1x8x768xf32, #tpu.memory_space<vmem>>, vector<1x8x768xf32>
    %12 = vector.shape_cast %11 : vector<1x8x768xf32> to vector<8x768xf32>
    %13 = arith.truncf %10 : vector<8x256xf32> to vector<8x256xbf16>
    %cst_20 = arith.constant dense<0.000000e+00> : vector<8x768xf32>
    %14 = tpu.matmul %13, %6, %cst_20 {dimension_numbers = #tpu.dot_dimension_numbers<[1], [0], [0], [1], [0, 0, 1, 1], [], []>} : vector<8x256xbf16>, vector<256x768xbf16>, vector<8x768xf32> -> vector<8x768xf32>
    %15 = vector.extract_strided_slice %12 {offsets = [0, 0], sizes = [8, 512], strides = [1, 1]} : vector<8x768xf32> to vector<8x512xf32>
    %16 = vector.extract_strided_slice %14 {offsets = [0, 0], sizes = [8, 512], strides = [1, 1]} : vector<8x768xf32> to vector<8x512xf32>
    %17 = arith.addf %15, %16 : vector<8x512xf32>
    %18 = vector.broadcast %7 : vector<1x512xf32> to vector<8x512xf32>
    %19 = arith.addf %17, %18 : vector<8x512xf32>
    %20 = arith.negf %19 : vector<8x512xf32>
    %21 = math.exp %20 : vector<8x512xf32>
    %cst_21 = arith.constant 1.000000e+00 : f32
    %22 = vector.broadcast %cst_21 : f32 to vector<8x512xf32>
    %23 = arith.addf %22, %21 : vector<8x512xf32>
    %24 = arith.divf %22, %23 : vector<8x512xf32>
    %25 = vector.extract_strided_slice %24 {offsets = [0, 0], sizes = [8, 256], strides = [1, 1]} : vector<8x512xf32> to vector<8x256xf32>
    %26 = vector.extract_strided_slice %24 {offsets = [0, 256], sizes = [8, 256], strides = [1, 1]} : vector<8x512xf32> to vector<8x256xf32>
    %27 = vector.extract_strided_slice %12 {offsets = [0, 512], sizes = [8, 256], strides = [1, 1]} : vector<8x768xf32> to vector<8x256xf32>
    %28 = vector.broadcast %8 : vector<1x256xf32> to vector<8x256xf32>
    %29 = arith.addf %27, %28 : vector<8x256xf32>
    %30 = vector.extract_strided_slice %14 {offsets = [0, 512], sizes = [8, 256], strides = [1, 1]} : vector<8x768xf32> to vector<8x256xf32>
    %31 = vector.broadcast %9 : vector<1x256xf32> to vector<8x256xf32>
    %32 = arith.addf %30, %31 : vector<8x256xf32>
    %33 = arith.mulf %25, %32 : vector<8x256xf32>
    %34 = arith.addf %29, %33 : vector<8x256xf32>
    %35 = math.tanh %34 : vector<8x256xf32>
    %cst_22 = arith.constant 1.000000e+00 : f32
    %36 = vector.broadcast %cst_22 : f32 to vector<8x256xf32>
    %37 = arith.subf %36, %26 : vector<8x256xf32>
    %38 = arith.mulf %37, %35 : vector<8x256xf32>
    %39 = arith.mulf %26, %10 : vector<8x256xf32>
    %40 = arith.addf %38, %39 : vector<8x256xf32>
    %c0_23 = arith.constant 0 : index
    %c0_24 = arith.constant 0 : index
    %c0_25 = arith.constant 0 : index
    %41 = vector.load %arg15[%c0_23, %c0_24, %c0_25] : memref<1x8x256xf32, #tpu.memory_space<vmem>>, vector<1x8x256xf32>
    %42 = vector.shape_cast %41 : vector<1x8x256xf32> to vector<8x256xf32>
    %43 = vector.shape_cast %40 : vector<8x256xf32> to vector<1x8x256xf32>
    tpu.vector_store %arg15[%c0_23, %c0_24, %c0_25], %43 {strides = array<i32>} : memref<1x8x256xf32, #tpu.memory_space<vmem>>, vector<1x8x256xf32>,
    %c0_26 = arith.constant 0 : index
    %c0_27 = arith.constant 0 : index
    %44 = vector.load %arg13[%c0_26, %c0_27] : memref<8x256xf32, #tpu.memory_space<vmem>>, vector<8x256xf32>
    tpu.vector_store %arg13[%c0_26, %c0_27], %40 {strides = array<i32>} : memref<8x256xf32, #tpu.memory_space<vmem>>, vector<8x256xf32>,
    %c0_28 = arith.constant 0 : index
    %c0_29 = arith.constant 0 : index
    %c0_30 = arith.constant 0 : index
    %45 = vector.load %arg15[%c0_28, %c0_29, %c0_30] : memref<1x8x256xf32, #tpu.memory_space<vmem>>, vector<1x8x256xf32>
    %46 = vector.shape_cast %45 : vector<1x8x256xf32> to vector<8x256xf32>
    %cst_31 = arith.constant 0.000000e+00 : f32
    %47 = vector.broadcast %cst_31 : f32 to vector<8x256xf32>
    %48 = arith.maximumf %46, %47 : vector<8x256xf32>
    %49 = arith.truncf %48 : vector<8x256xf32> to vector<8x256xbf16>
    %c0_32 = arith.constant 0 : index
    %c0_33 = arith.constant 0 : index
    %50 = vector.load %arg8[%c0_32, %c0_33] : memref<256x256xbf16, #tpu.memory_space<vmem>>, vector<256x256xbf16>
    %cst_34 = arith.constant dense<0.000000e+00> : vector<8x256xf32>
    %51 = tpu.matmul %49, %50, %cst_34 {dimension_numbers = #tpu.dot_dimension_numbers<[1], [0], [0], [1], [0, 0, 1, 1], [], []>} : vector<8x256xbf16>, vector<256x256xbf16>, vector<8x256xf32> -> vector<8x256xf32>
    %c0_35 = arith.constant 0 : index
    %c0_36 = arith.constant 0 : index
    %52 = vector.load %arg9[%c0_35, %c0_36] : memref<1x256xf32, #tpu.memory_space<vmem>>, vector<1x256xf32>
    %53 = vector.broadcast %52 : vector<1x256xf32> to vector<8x256xf32>
    %54 = arith.addf %51, %53 : vector<8x256xf32>
    %cst_37 = arith.constant 0.000000e+00 : f32
    %55 = vector.broadcast %cst_37 : f32 to vector<8x256xf32>
    %56 = arith.maximumf %54, %55 : vector<8x256xf32>
    %57 = arith.truncf %56 : vector<8x256xf32> to vector<8x256xbf16>
    %c0_38 = arith.constant 0 : index
    %c0_39 = arith.constant 0 : index
    %58 = vector.load %arg10[%c0_38, %c0_39] : memref<256x128xbf16, #tpu.memory_space<vmem>>, vector<256x128xbf16>
    %cst_40 = arith.constant dense<0.000000e+00> : vector<8x128xf32>
    %59 = tpu.matmul %57, %58, %cst_40 {dimension_numbers = #tpu.dot_dimension_numbers<[1], [0], [0], [1], [0, 0, 1, 1], [], []>} : vector<8x256xbf16>, vector<256x128xbf16>, vector<8x128xf32> -> vector<8x128xf32>
    %c0_41 = arith.constant 0 : index
    %c0_42 = arith.constant 0 : index
    %60 = vector.load %arg11[%c0_41, %c0_42] : memref<1x128xf32, #tpu.memory_space<vmem>>, vector<1x128xf32>
    %61 = vector.broadcast %60 : vector<1x128xf32> to vector<8x128xf32>
    %62 = arith.addf %59, %61 : vector<8x128xf32>
    %63 = tpu.iota {dimensions = array<i32: 1>} : vector<8x128xi32>
    %c18_i32 = arith.constant 18 : i32
    %64 = vector.broadcast %c18_i32 : i32 to vector<8x128xi32>
    %65 = arith.cmpi slt, %63, %64 : vector<8x128xi32>
    %cst_43 = arith.constant -1.000000e+30 : f32
    %66 = vector.broadcast %cst_43 : f32 to vector<8x128xf32>
    %67 = arith.select %65, %62, %66 : vector<8x128xi1>, vector<8x128xf32>
    %cst_44 = arith.constant dense<0xFF800000> : vector<8xf32>
    %68 = vector.multi_reduction <maximumf>, %67, %cst_44 [1] : vector<8x128xf32> to vector<8xf32>
    %69 = vector.shape_cast %68 : vector<8xf32> to vector<8x1xf32>
    %70 = vector.broadcast %69 : vector<8x1xf32> to vector<8x128xf32>
    %71 = arith.subf %67, %70 : vector<8x128xf32>
    %72 = math.exp %71 : vector<8x128xf32>
    %cst_45 = arith.constant dense<0.000000e+00> : vector<8xf32>
    %73 = vector.multi_reduction <add>, %72, %cst_45 [1] : vector<8x128xf32> to vector<8xf32>
    %74 = vector.shape_cast %73 : vector<8xf32> to vector<8x1xf32>
    %75 = vector.broadcast %74 : vector<8x1xf32> to vector<8x128xf32>
    %76 = arith.divf %72, %75 : vector<8x128xf32>
    %77 = vector.broadcast %69 : vector<8x1xf32> to vector<8x128xf32>
    %78 = arith.subf %67, %77 : vector<8x128xf32>
    %79 = math.log %74 : vector<8x1xf32>
    %80 = vector.broadcast %79 : vector<8x1xf32> to vector<8x128xf32>
    %81 = arith.subf %78, %80 : vector<8x128xf32>
    %82 = arith.mulf %76, %81 : vector<8x128xf32>
    %cst_46 = arith.constant 0.000000e+00 : f32
    %83 = vector.broadcast %cst_46 : f32 to vector<8x128xf32>
    %84 = arith.select %65, %82, %83 : vector<8x128xi1>, vector<8x128xf32>
    %cst_47 = arith.constant dense<0.000000e+00> : vector<8xf32>
    %85 = vector.multi_reduction <add>, %84, %cst_47 [1] : vector<8x128xf32> to vector<8xf32>
    %86 = vector.shape_cast %85 : vector<8xf32> to vector<8x1xf32>
    %cst_48 = arith.constant 0.000000e+00 : f32
    %87 = vector.broadcast %cst_48 : f32 to vector<8x1xf32>
    %88 = arith.subf %87, %86 : vector<8x1xf32>
    %c0_49 = arith.constant 0 : index
    %c0_50 = arith.constant 0 : index
    %c0_51 = arith.constant 0 : index
    %89 = vector.load %arg2[%c0_49, %c0_50, %c0_51] : memref<1x8x128xf32, #tpu.memory_space<vmem>>, vector<1x8x128xf32>
    %90 = vector.shape_cast %89 : vector<1x8x128xf32> to vector<8x128xf32>
    %91 = arith.addf %81, %90 : vector<8x128xf32>
    %cst_52 = arith.constant -1.000000e+30 : f32
    %92 = vector.broadcast %cst_52 : f32 to vector<8x128xf32>
    %93 = arith.select %65, %91, %92 : vector<8x128xi1>, vector<8x128xf32>
    %cst_53 = arith.constant dense<0xFF800000> : vector<8xf32>
    %94 = vector.multi_reduction <maximumf>, %93, %cst_53 [1] : vector<8x128xf32> to vector<8xf32>
    %95 = vector.shape_cast %94 : vector<8xf32> to vector<8x1xf32>
    %96 = vector.broadcast %95 : vector<8x1xf32> to vector<8x128xf32>
    %97 = arith.cmpf oeq, %93, %96 : vector<8x128xf32>
    %c128_i32 = arith.constant 128 : i32
    %98 = vector.broadcast %c128_i32 : i32 to vector<8x128xi32>
    %99 = arith.select %97, %63, %98 : vector<8x128xi1>, vector<8x128xi32>
    %cst_54 = arith.constant dense<2147483647> : vector<8xi32>
    %100 = vector.multi_reduction <minsi>, %99, %cst_54 [1] : vector<8x128xi32> to vector<8xi32>
    %101 = vector.shape_cast %100 : vector<8xi32> to vector<8x1xi32>
    %102 = vector.broadcast %101 : vector<8x1xi32> to vector<8x128xi32>
    %103 = arith.cmpi eq, %63, %102 : vector<8x128xi32>
    %cst_55 = arith.constant 0.000000e+00 : f32
    %104 = vector.broadcast %cst_55 : f32 to vector<8x128xf32>
    %105 = arith.select %103, %81, %104 : vector<8x128xi1>, vector<8x128xf32>
    %cst_56 = arith.constant dense<0.000000e+00> : vector<8xf32>
    %106 = vector.multi_reduction <add>, %105, %cst_56 [1] : vector<8x128xf32> to vector<8xf32>
    %107 = vector.shape_cast %106 : vector<8xf32> to vector<8x1xf32>
    %c0_i32 = arith.constant 0 : i32
    %108 = vector.broadcast %c0_i32 : i32 to vector<8x128xi32>
    %109 = arith.cmpi eq, %63, %108 : vector<8x128xi32>
    %110 = arith.sitofp %101 : vector<8x1xi32> to vector<8x1xf32>
    %c1_i32 = arith.constant 1 : i32
    %111 = vector.broadcast %c1_i32 : i32 to vector<8x128xi32>
    %112 = arith.cmpi eq, %63, %111 : vector<8x128xi32>
    %c2_i32 = arith.constant 2 : i32
    %113 = vector.broadcast %c2_i32 : i32 to vector<8x128xi32>
    %114 = arith.cmpi eq, %63, %113 : vector<8x128xi32>
    %cst_57 = arith.constant 0.000000e+00 : f32
    %115 = vector.shape_cast %88 : vector<8x1xf32> to vector<8x1xf32>
    %116 = vector.broadcast %115 : vector<8x1xf32> to vector<8x128xf32>
    %117 = vector.broadcast %cst_57 : f32 to vector<8x128xf32>
    %118 = arith.select %114, %116, %117 : vector<8x128xi1>, vector<8x128xf32>
    %119 = vector.shape_cast %107 : vector<8x1xf32> to vector<8x1xf32>
    %120 = vector.broadcast %119 : vector<8x1xf32> to vector<8x128xf32>
    %121 = arith.select %112, %120, %118 : vector<8x128xi1>, vector<8x128xf32>
    %122 = vector.shape_cast %110 : vector<8x1xf32> to vector<8x1xf32>
    %123 = vector.broadcast %122 : vector<8x1xf32> to vector<8x128xf32>
    %124 = arith.select %109, %123, %121 : vector<8x128xi1>, vector<8x128xf32>
    %125 = vector.shape_cast %124 : vector<8x128xf32> to vector<1x8x128xf32>
    %c0_58 = arith.constant 0 : index
    %c0_59 = arith.constant 0 : index
    %c0_60 = arith.constant 0 : index
    %126 = vector.load %arg12[%c0_58, %c0_59, %c0_60] : memref<1x8x128xf32, #tpu.memory_space<vmem>>, vector<1x8x128xf32>
    tpu.vector_store %arg12[%c0_58, %c0_59, %c0_60], %125 {strides = array<i32>} : memref<1x8x128xf32, #tpu.memory_space<vmem>>, vector<1x8x128xf32>,
    return
  }
}

</mosaic_0001>

<llo_original>
// kernel: recurrent_actor_rollout.1
$region0: #{recurrent_actor_rollout.1}
  #allocation0 [shape = 'u32[]', space=smem, size = 0x4, offset = 0x4, fixed_abs, tag = 'smem constant byte address 0x4 - core index']
  #allocation1 [shape = 'u32[144,128]{1,0:T(1,128)}', space=vmem, size = 0x12000, scoped, tag = 'internal scratch']
  #allocation2 [shape = 'f32[1,8,768]{2,1,0:T(8,128)}', space=vmem, size = 0x6000, scoped, tag = 'scratch operand']
  #allocation3 [shape = 'f32[1,8,256]{2,1,0:T(8,128)}', space=vmem, size = 0x2000, scoped, tag = 'scratch operand']
  %s0 = inlined_call_operand.vmem [shape: bf16[1,8,128], index: 0, kind: input, shape index: {}]
  %s1 = inlined_call_operand.vmem [shape: f32[8,256], index: 1, kind: input, shape index: {}]
  %s2 = inlined_call_operand.vmem [shape: f32[1,8,128], index: 2, kind: input, shape index: {}]
  %s3 = inlined_call_operand.hbm [shape: bf16[128,768], index: 3, kind: input, shape index: {}]
  %s4 = inlined_call_operand.hbm [shape: bf16[256,768], index: 4, kind: input, shape index: {}]
  %s5 = inlined_call_operand.vmem [shape: f32[1,512], index: 5, kind: input, shape index: {}]
  %s6 = inlined_call_operand.vmem [shape: f32[1,256], index: 6, kind: input, shape index: {}]
  %s7 = inlined_call_operand.vmem [shape: f32[1,256], index: 7, kind: input, shape index: {}]
  %s8 = inlined_call_operand.hbm [shape: bf16[256,256], index: 8, kind: input, shape index: {}]
  %s9 = inlined_call_operand.hbm [shape: f32[1,256], index: 9, kind: input, shape index: {}]
  %s10 = inlined_call_operand.vmem [shape: bf16[256,128], index: 10, kind: input, shape index: {}]
  %s11 = inlined_call_operand.vmem [shape: f32[1,128], index: 11, kind: input, shape index: {}]
  %s12 = inlined_call_operand.vmem [shape: f32[1,8,128], index: 12, kind: output, shape index: {0}]
  %s13 = inlined_call_operand.hbm [shape: f32[8,256], index: 13, kind: output, shape index: {1}]
  %14 = xla_tuple %s12, %s13
  %s15 = sld [smem:[#allocation0]]
  $region82: #{recurrent_actor_rollout.1} parent=0
    _
  %s17 = ssub.s32 1, %s15
  %s18 = scalar_select 0, %s17, %s15
  $region1: #{recurrent_actor_rollout.1} parent=0
    #allocation4 [shape = 'u8[196608]{0}', space=vmem, size = 0x30000, scoped, tag = 'input window, operand 3, single buffered']
    #allocation5 [shape = 's32[1]{0}', space=sflag, size = 0x4, scoped, tag = 'scoped memory for recurrent_actor_rollout.1']
    #allocation6 [shape = 's32[1]{0}', space=sflag, size = 0x4, scoped, tag = 'scoped memory for recurrent_actor_rollout.1']
    #allocation7 [shape = 'u8[393216]{0}', space=vmem, size = 0x60000, scoped, tag = 'input window, operand 4, single buffered']
    #allocation8 [shape = 's32[1]{0}', space=sflag, size = 0x4, scoped, tag = 'scoped memory for recurrent_actor_rollout.1']
    #allocation9 [shape = 'u8[131072]{0}', space=vmem, size = 0x20000, scoped, tag = 'input window, operand 8, single buffered']
    #allocation10 [shape = 'u8[1024]{0}', space=vmem, size = 0x400, scoped, tag = 'input window, operand 9, single buffered']
    #allocation11 [shape = 's32[1]{0}', space=sflag, size = 0x4, scoped, tag = 'scoped memory for recurrent_actor_rollout.1']
    #allocation12 [shape = 'u8[8192]{0}', space=vmem, size = 0x2000, scoped, tag = 'output window, operand 1, single buffered']
    %19 = vsyncpa [#allocation5], 0
    %20 = vsyncpa [#allocation8], 0
    %21 = vsyncpa [#allocation11], 0
    %22 = vsyncpa [#allocation6], 0
    // Predicated region
    $region2: #{recurrent_actor_rollout.1} parent=1 // pred_check
      _
    $region3: #{recurrent_actor_rollout.1} parent=1 // pred_check_branch
      %24 = sbr.rel (0) target = $region5
    $region4: #{recurrent_actor_rollout.1} parent=1 // pred_region
      _
    $region5: #{recurrent_actor_rollout.1} parent=1 // pred_fallthru
      _
    // Predicated region
    $region6: #{recurrent_actor_rollout.1} parent=1 // pred_check
      _
    $region7: #{recurrent_actor_rollout.1} parent=1 // pred_check_branch
      %26 = sbr.rel (0) target = $region9
    $region8: #{recurrent_actor_rollout.1} parent=1 // pred_region
      _
    $region9: #{recurrent_actor_rollout.1} parent=1 // pred_fallthru
      _
    // Predicated region
    $region10: #{recurrent_actor_rollout.1} parent=1 // pred_check
      _
    $region11: #{recurrent_actor_rollout.1} parent=1 // pred_check_branch
      %28 = sbr.rel (0) target = $region13
    $region12: #{recurrent_actor_rollout.1} parent=1 // pred_region
      _
    $region13: #{recurrent_actor_rollout.1} parent=1 // pred_fallthru
      _
    // Predicated region
    $region14: #{recurrent_actor_rollout.1} parent=1 // pred_check
      _
    $region15: #{recurrent_actor_rollout.1} parent=1 // pred_check_branch
      %30 = sbr.rel (0) target = $region17
    $region16: #{recurrent_actor_rollout.1} parent=1 // pred_region
      %s32 = ssub.s32 6144, 6144
      %33 = vsyncadd [#allocation5], %s32
      %s34 = sshll.u32 [#allocation4], 4
      %s35 = int_to_ptr.vmem [resolvable:$true] %s34
      %40 = dma.hbm_to_vmem [thread:$0]  %s3, 6144, %s35, [#allocation5], 384, 384, 24
    $region17: #{recurrent_actor_rollout.1} parent=1 // pred_fallthru
      _
    // Predicated region
    $region18: #{recurrent_actor_rollout.1} parent=1 // pred_check
      _
    $region19: #{recurrent_actor_rollout.1} parent=1 // pred_check_branch
      %42 = sbr.rel (0) target = $region21
    $region20: #{recurrent_actor_rollout.1} parent=1 // pred_region
      %s44 = ssub.s32 12288, 12288
      %45 = vsyncadd [#allocation8], %s44
      %s46 = sshll.u32 [#allocation7], 4
      %s47 = int_to_ptr.vmem [resolvable:$true] %s46
      %52 = dma.hbm_to_vmem [thread:$0]  %s4, 12288, %s47, [#allocation8], 384, 384, 24
    $region21: #{recurrent_actor_rollout.1} parent=1 // pred_fallthru
      _
    // Predicated region
    $region22: #{recurrent_actor_rollout.1} parent=1 // pred_check
      _
    $region23: #{recurrent_actor_rollout.1} parent=1 // pred_check_branch
      %54 = sbr.rel (0) target = $region25
    $region24: #{recurrent_actor_rollout.1} parent=1 // pred_region
      _
    $region25: #{recurrent_actor_rollout.1} parent=1 // pred_fallthru
      _
    // Predicated region
    $region26: #{recurrent_actor_rollout.1} parent=1 // pred_check
      _
    $region27: #{recurrent_actor_rollout.1} parent=1 // pred_check_branch
      %56 = sbr.rel (0) target = $region29
    $region28: #{recurrent_actor_rollout.1} parent=1 // pred_region
      _
    $region29: #{recurrent_actor_rollout.1} parent=1 // pred_fallthru
      _
    // Predicated region
    $region30: #{recurrent_actor_rollout.1} parent=1 // pred_check
      _
    $region31: #{recurrent_actor_rollout.1} parent=1 // pred_check_branch
      %58 = sbr.rel (0) target = $region33
    $region32: #{recurrent_actor_rollout.1} parent=1 // pred_region
      _
    $region33: #{recurrent_actor_rollout.1} parent=1 // pred_fallthru
      _
    // Predicated region
    $region34: #{recurrent_actor_rollout.1} parent=1 // pred_check
      _
    $region35: #{recurrent_actor_rollout.1} parent=1 // pred_check_branch
      %60 = sbr.rel (0) target = $region37
    $region36: #{recurrent_actor_rollout.1} parent=1 // pred_region
      %s62 = ssub.s32 4096, 4096
      %63 = vsyncadd [#allocation8], %s62
      %s64 = sshll.u32 [#allocation9], 4
      %s65 = int_to_ptr.vmem [resolvable:$true] %s64
      %70 = dma.hbm_to_vmem [thread:$0]  %s8, 4096, %s65, [#allocation8], 128, 128, 8
    $region37: #{recurrent_actor_rollout.1} parent=1 // pred_fallthru
      _
    // Predicated region
    $region38: #{recurrent_actor_rollout.1} parent=1 // pred_check
      _
    $region39: #{recurrent_actor_rollout.1} parent=1 // pred_check_branch
      %72 = sbr.rel (0) target = $region41
    $region40: #{recurrent_actor_rollout.1} parent=1 // pred_region
      %s74 = ssub.s32 32, 32
      %75 = vsyncadd [#allocation11], %s74
      %s77 = sshll.u32 [#allocation10], 4
      %s78 = int_to_ptr.vmem [resolvable:$true] %s77
      %80 = dma.hbm_to_vmem [thread:$0]  %s9, 32, %s78, [#allocation11]
    $region41: #{recurrent_actor_rollout.1} parent=1 // pred_fallthru
      _
    // Predicated region
    $region42: #{recurrent_actor_rollout.1} parent=1 // pred_check
      _
    $region43: #{recurrent_actor_rollout.1} parent=1 // pred_check_branch
      %82 = sbr.rel (0) target = $region45
    $region44: #{recurrent_actor_rollout.1} parent=1 // pred_region
      _
    $region45: #{recurrent_actor_rollout.1} parent=1 // pred_fallthru
      _
    // Predicated region
    $region46: #{recurrent_actor_rollout.1} parent=1 // pred_check
      _
    $region47: #{recurrent_actor_rollout.1} parent=1 // pred_check_branch
      %84 = sbr.rel (0) target = $region49
    $region48: #{recurrent_actor_rollout.1} parent=1 // pred_region
      _
    $region49: #{recurrent_actor_rollout.1} parent=1 // pred_fallthru
      _
    // Predicated region
    $region50: #{recurrent_actor_rollout.1} parent=1 // pred_check
      _
    $region51: #{recurrent_actor_rollout.1} parent=1 // pred_check_branch
      %86 = sbr.rel (0) target = $region53
    $region52: #{recurrent_actor_rollout.1} parent=1 // pred_region
      %87 = dma.done [#allocation5], 6144
    $region53: #{recurrent_actor_rollout.1} parent=1 // pred_fallthru
      _
    // Predicated region
    $region54: #{recurrent_actor_rollout.1} parent=1 // pred_check
      _
    $region55: #{recurrent_actor_rollout.1} parent=1 // pred_check_branch
      %89 = sbr.rel (0) target = $region57
    $region56: #{recurrent_actor_rollout.1} parent=1 // pred_region
      %90 = dma.done [#allocation8], 12288
    $region57: #{recurrent_actor_rollout.1} parent=1 // pred_fallthru
      _
    // Predicated region
    $region58: #{recurrent_actor_rollout.1} parent=1 // pred_check
      _
    $region59: #{recurrent_actor_rollout.1} parent=1 // pred_check_branch
      %92 = sbr.rel (0) target = $region61
    $region60: #{recurrent_actor_rollout.1} parent=1 // pred_region
      %93 = dma.done [#allocation8], 4096
    $region61: #{recurrent_actor_rollout.1} parent=1 // pred_fallthru
      _
    // Predicated region
    $region62: #{recurrent_actor_rollout.1} parent=1 // pred_check
      _
    $region63: #{recurrent_actor_rollout.1} parent=1 // pred_check_branch
      %95 = sbr.rel (0) target = $region65
    $region64: #{recurrent_actor_rollout.1} parent=1 // pred_region
      %96 = dma.done [#allocation11], 32
    $region65: #{recurrent_actor_rollout.1} parent=1 // pred_fallthru
      _
    %v98 = vld [vmem:[%s0] sm:$0xf]
    %v99 = vld [vmem:[#allocation4] sm:$0xff]
    %v100 = vld [vmem:[#allocation4 + $0x8] sm:$0xff]
    %v101 = vld [vmem:[#allocation4 + $0x10] sm:$0xff]
    %v102 = vld [vmem:[#allocation4 + $0x18] sm:$0xff]
    %v103 = vld [vmem:[#allocation4 + $0x20] sm:$0xff]
    %v104 = vld [vmem:[#allocation4 + $0x28] sm:$0xff]
    %v105 = vld [vmem:[#allocation4 + $0x30] sm:$0xff]
    %v106 = vld [vmem:[#allocation4 + $0x38] sm:$0xff]
    %v107 = vld [vmem:[#allocation4 + $0x40] sm:$0xff]
    %v108 = vld [vmem:[#allocation4 + $0x48] sm:$0xff]
    %v109 = vld [vmem:[#allocation4 + $0x50] sm:$0xff]
    %v110 = vld [vmem:[#allocation4 + $0x58] sm:$0xff]
    %v111 = vld [vmem:[#allocation4 + $0x60] sm:$0xff]
    %v112 = vld [vmem:[#allocation4 + $0x68] sm:$0xff]
    %v113 = vld [vmem:[#allocation4 + $0x70] sm:$0xff]
    %v114 = vld [vmem:[#allocation4 + $0x78] sm:$0xff]
    %v115 = vld [vmem:[#allocation4 + $0x80] sm:$0xff]
    %v116 = vld [vmem:[#allocation4 + $0x88] sm:$0xff]
    %v117 = vld [vmem:[#allocation4 + $0x90] sm:$0xff]
    %v118 = vld [vmem:[#allocation4 + $0x98] sm:$0xff]
    %v119 = vld [vmem:[#allocation4 + $0xa0] sm:$0xff]
    %v120 = vld [vmem:[#allocation4 + $0xa8] sm:$0xff]
    %v121 = vld [vmem:[#allocation4 + $0xb0] sm:$0xff]
    %v122 = vld [vmem:[#allocation4 + $0xb8] sm:$0xff]
    %v123 = vld [vmem:[#allocation4 + $0xc0] sm:$0xff]
    %v124 = vld [vmem:[#allocation4 + $0xc8] sm:$0xff]
    %v125 = vld [vmem:[#allocation4 + $0xd0] sm:$0xff]
    %v126 = vld [vmem:[#allocation4 + $0xd8] sm:$0xff]
    %v127 = vld [vmem:[#allocation4 + $0xe0] sm:$0xff]
    %v128 = vld [vmem:[#allocation4 + $0xe8] sm:$0xff]
    %v129 = vld [vmem:[#allocation4 + $0xf0] sm:$0xff]
    %v130 = vld [vmem:[#allocation4 + $0xf8] sm:$0xff]
    %v131 = vld [vmem:[#allocation4 + $0x100] sm:$0xff]
    %v132 = vld [vmem:[#allocation4 + $0x108] sm:$0xff]
    %v133 = vld [vmem:[#allocation4 + $0x110] sm:$0xff]
    %v134 = vld [vmem:[#allocation4 + $0x118] sm:$0xff]
    %v135 = vld [vmem:[#allocation4 + $0x120] sm:$0xff]
    %v136 = vld [vmem:[#allocation4 + $0x128] sm:$0xff]
    %v137 = vld [vmem:[#allocation4 + $0x130] sm:$0xff]
    %v138 = vld [vmem:[#allocation4 + $0x138] sm:$0xff]
    %v139 = vld [vmem:[#allocation4 + $0x140] sm:$0xff]
    %v140 = vld [vmem:[#allocation4 + $0x148] sm:$0xff]
    %v141 = vld [vmem:[#allocation4 + $0x150] sm:$0xff]
    %v142 = vld [vmem:[#allocation4 + $0x158] sm:$0xff]
    %v143 = vld [vmem:[#allocation4 + $0x160] sm:$0xff]
    %v144 = vld [vmem:[#allocation4 + $0x168] sm:$0xff]
    %v145 = vld [vmem:[#allocation4 + $0x170] sm:$0xff]
    %v146 = vld [vmem:[#allocation4 + $0x178] sm:$0xff]
    %v195 = vunpack.c.l.b16 %v99
    %v196 = vunpack.c.h.b16 %v99
    %v197 = vunpack.c.l.b16 %v100
    %v198 = vunpack.c.h.b16 %v100
    %v199 = vunpack.c.l.b16 %v101
    %v200 = vunpack.c.h.b16 %v101
    %v201 = vunpack.c.l.b16 %v102
    %v202 = vunpack.c.h.b16 %v102
    %v203 = vunpack.c.l.b16 %v103
    %v204 = vunpack.c.h.b16 %v103
    %v205 = vunpack.c.l.b16 %v104
    %v206 = vunpack.c.h.b16 %v104
    %v207 = vunpack.c.l.b16 %v105
    %v208 = vunpack.c.h.b16 %v105
    %v209 = vunpack.c.l.b16 %v106
    %v210 = vunpack.c.h.b16 %v106
    %v211 = vunpack.c.l.b16 %v107
    %v212 = vunpack.c.h.b16 %v107
    %v213 = vunpack.c.l.b16 %v108
    %v214 = vunpack.c.h.b16 %v108
    %v215 = vunpack.c.l.b16 %v109
    %v216 = vunpack.c.h.b16 %v109
    %v217 = vunpack.c.l.b16 %v110
    %v218 = vunpack.c.h.b16 %v110
    %v219 = vunpack.c.l.b16 %v111
    %v220 = vunpack.c.h.b16 %v111
    %v221 = vunpack.c.l.b16 %v112
    %v222 = vunpack.c.h.b16 %v112
    %v223 = vunpack.c.l.b16 %v113
    %v224 = vunpack.c.h.b16 %v113
    %v225 = vunpack.c.l.b16 %v114
    %v226 = vunpack.c.h.b16 %v114
    %v227 = vunpack.c.l.b16 %v115
    %v228 = vunpack.c.h.b16 %v115
    %v229 = vunpack.c.l.b16 %v116
    %v230 = vunpack.c.h.b16 %v116
    %v231 = vunpack.c.l.b16 %v117
    %v232 = vunpack.c.h.b16 %v117
    %v233 = vunpack.c.l.b16 %v118
    %v234 = vunpack.c.h.b16 %v118
    %v235 = vunpack.c.l.b16 %v119
    %v236 = vunpack.c.h.b16 %v119
    %v237 = vunpack.c.l.b16 %v120
    %v238 = vunpack.c.h.b16 %v120
    %v239 = vunpack.c.l.b16 %v121
    %v240 = vunpack.c.h.b16 %v121
    %v241 = vunpack.c.l.b16 %v122
    %v242 = vunpack.c.h.b16 %v122
    %v243 = vunpack.c.l.b16 %v123
    %v244 = vunpack.c.h.b16 %v123
    %v245 = vunpack.c.l.b16 %v124
    %v246 = vunpack.c.h.b16 %v124
    %v247 = vunpack.c.l.b16 %v125
    %v248 = vunpack.c.h.b16 %v125
    %v249 = vunpack.c.l.b16 %v126
    %v250 = vunpack.c.h.b16 %v126
    %v251 = vunpack.c.l.b16 %v127
    %v252 = vunpack.c.h.b16 %v127
    %v253 = vunpack.c.l.b16 %v128
    %v254 = vunpack.c.h.b16 %v128
    %v255 = vunpack.c.l.b16 %v129
    %v256 = vunpack.c.h.b16 %v129
    %v257 = vunpack.c.l.b16 %v130
    %v258 = vunpack.c.h.b16 %v130
    %v259 = vunpack.c.l.b16 %v131
    %v260 = vunpack.c.h.b16 %v131
    %v261 = vunpack.c.l.b16 %v132
    %v262 = vunpack.c.h.b16 %v132
    %v263 = vunpack.c.l.b16 %v133
    %v264 = vunpack.c.h.b16 %v133
    %v265 = vunpack.c.l.b16 %v134
    %v266 = vunpack.c.h.b16 %v134
    %v267 = vunpack.c.l.b16 %v135
    %v268 = vunpack.c.h.b16 %v135
    %v269 = vunpack.c.l.b16 %v136
    %v270 = vunpack.c.h.b16 %v136
    %v271 = vunpack.c.l.b16 %v137
    %v272 = vunpack.c.h.b16 %v137
    %v273 = vunpack.c.l.b16 %v138
    %v274 = vunpack.c.h.b16 %v138
    %v275 = vunpack.c.l.b16 %v139
    %v276 = vunpack.c.h.b16 %v139
    %v277 = vunpack.c.l.b16 %v140
    %v278 = vunpack.c.h.b16 %v140
    %v279 = vunpack.c.l.b16 %v141
    %v280 = vunpack.c.h.b16 %v141
    %v281 = vunpack.c.l.b16 %v142
    %v282 = vunpack.c.h.b16 %v142
    %v283 = vunpack.c.l.b16 %v143
    %v284 = vunpack.c.h.b16 %v143
    %v285 = vunpack.c.l.b16 %v144
    %v286 = vunpack.c.h.b16 %v144
    %v287 = vunpack.c.l.b16 %v145
    %v288 = vunpack.c.h.b16 %v145
    %v289 = vunpack.c.l.b16 %v146
    %v290 = vunpack.c.h.b16 %v146
    %v291 = vpack.c.b16 %v201, %v195
    %v292 = vpack.c.b16 %v202, %v196
    %v293 = vpack.c.b16 %v203, %v197
    %v294 = vpack.c.b16 %v204, %v198
    %v295 = vpack.c.b16 %v205, %v199
    %v296 = vpack.c.b16 %v206, %v200
    %v297 = vpack.c.b16 %v213, %v207
    %v298 = vpack.c.b16 %v214, %v208
    %v299 = vpack.c.b16 %v215, %v209
    %v300 = vpack.c.b16 %v216, %v210
    %v301 = vpack.c.b16 %v217, %v211
    %v302 = vpack.c.b16 %v218, %v212
    %v303 = vpack.c.b16 %v225, %v219
    %v304 = vpack.c.b16 %v226, %v220
    %v305 = vpack.c.b16 %v227, %v221
    %v306 = vpack.c.b16 %v228, %v222
    %v307 = vpack.c.b16 %v229, %v223
    %v308 = vpack.c.b16 %v230, %v224
    %v309 = vpack.c.b16 %v237, %v231
    %v310 = vpack.c.b16 %v238, %v232
    %v311 = vpack.c.b16 %v239, %v233
    %v312 = vpack.c.b16 %v240, %v234
    %v313 = vpack.c.b16 %v241, %v235
    %v314 = vpack.c.b16 %v242, %v236
    %v315 = vpack.c.b16 %v249, %v243
    %v316 = vpack.c.b16 %v250, %v244
    %v317 = vpack.c.b16 %v251, %v245
    %v318 = vpack.c.b16 %v252, %v246
    %v319 = vpack.c.b16 %v253, %v247
    %v320 = vpack.c.b16 %v254, %v248
    %v321 = vpack.c.b16 %v261, %v255
    %v322 = vpack.c.b16 %v262, %v256
    %v323 = vpack.c.b16 %v263, %v257
    %v324 = vpack.c.b16 %v264, %v258
    %v325 = vpack.c.b16 %v265, %v259
    %v326 = vpack.c.b16 %v266, %v260
    %v327 = vpack.c.b16 %v273, %v267
    %v328 = vpack.c.b16 %v274, %v268
    %v329 = vpack.c.b16 %v275, %v269
    %v330 = vpack.c.b16 %v276, %v270
    %v331 = vpack.c.b16 %v277, %v271
    %v332 = vpack.c.b16 %v278, %v272
    %v333 = vpack.c.b16 %v285, %v279
    %v334 = vpack.c.b16 %v286, %v280
    %v335 = vpack.c.b16 %v287, %v281
    %v336 = vpack.c.b16 %v288, %v282
    %v337 = vpack.c.b16 %v289, %v283
    %v338 = vpack.c.b16 %v290, %v284
    %387 = vmatprep.subr.bf16.mxu0 %v292
    %388 = vmatpush1.bf16.msra.mxu0 %v291
    %389 = vmatprep.subr.bf16.mxu0 %v298
    %390 = vmatpush1.bf16.msra.mxu0 %v297
    %391 = vmatprep.subr.bf16.mxu0 %v304
    %392 = vmatpush1.bf16.msra.mxu0 %v303
    %393 = vmatprep.subr.bf16.mxu0 %v310
    %394 = vmatpush1.bf16.msra.mxu0 %v309
    %395 = vmatprep.subr.bf16.mxu0 %v316
    %396 = vmatpush1.bf16.msra.mxu0 %v315
    %397 = vmatprep.subr.bf16.mxu0 %v322
    %398 = vmatpush1.bf16.msra.mxu0 %v321
    %399 = vmatprep.subr.bf16.mxu0 %v328
    %400 = vmatpush1.bf16.msra.mxu0 %v327
    %401 = vmatprep.subr.bf16.mxu0 %v334
    %402 = vmatpush1.bf16.msra.mxu0 %v333
    %403 = vmatprep.subr.bf16.mxu0 0
    %404 = vmatpush1.bf16.msra.mxu0 0
    %405 = vmatprep.subr.bf16.mxu0 0
    %406 = vmatpush1.bf16.msra.mxu0 0
    %407 = vmatprep.subr.bf16.mxu0 0
    %408 = vmatpush1.bf16.msra.mxu0 0
    %409 = vmatprep.subr.bf16.mxu0 0
    %410 = vmatpush1.bf16.msra.mxu0 0
    %411 = vmatprep.subr.bf16.mxu0 0
    %412 = vmatpush1.bf16.msra.mxu0 0
    %413 = vmatprep.subr.bf16.mxu0 0
    %414 = vmatpush1.bf16.msra.mxu0 0
    %415 = vmatprep.subr.bf16.mxu0 0
    %416 = vmatpush1.bf16.msra.mxu0 0
    %417 = vmatprep.subr.bf16.mxu0 0
    %418 = vmatpush1.bf16.msra.mxu0 0
    %419 = vmatprep.mubr.bf16.mxu0 0
    %420 = vmatmul.mubr.bf16.gmra.mrb[0].mxu0 %v98
    %v421 = vpop.f32.mrb[0].mxu0
    %v422 = vadd.f32 0.0, %v421
    %v423 = vpop.f32.mrb[0].mxu0
    %v424 = vadd.f32 0.0, %v423
    %v425 = vpop.f32.mrb[0].mxu0
    %v426 = vpop.f32.mrb[0].mxu0
    %427 = vdwg.mxu0
    %428 = vmatprep.subr.bf16.mxu0 %v294
    %429 = vmatpush1.bf16.msra.mxu0 %v293
    %430 = vmatprep.subr.bf16.mxu0 %v300
    %431 = vmatpush1.bf16.msra.mxu0 %v299
    %432 = vmatprep.subr.bf16.mxu0 %v306
    %433 = vmatpush1.bf16.msra.mxu0 %v305
    %434 = vmatprep.subr.bf16.mxu0 %v312
    %435 = vmatpush1.bf16.msra.mxu0 %v311
    %436 = vmatprep.subr.bf16.mxu0 %v318
    %437 = vmatpush1.bf16.msra.mxu0 %v317
    %438 = vmatprep.subr.bf16.mxu0 %v324
    %439 = vmatpush1.bf16.msra.mxu0 %v323
    %440 = vmatprep.subr.bf16.mxu0 %v330
    %441 = vmatpush1.bf16.msra.mxu0 %v329
    %442 = vmatprep.subr.bf16.mxu0 %v336
    %443 = vmatpush1.bf16.msra.mxu0 %v335
    %444 = vmatprep.subr.bf16.mxu0 0
    %445 = vmatpush1.bf16.msra.mxu0 0
    %446 = vmatprep.subr.bf16.mxu0 0
    %447 = vmatpush1.bf16.msra.mxu0 0
    %448 = vmatprep.subr.bf16.mxu0 0
    %449 = vmatpush1.bf16.msra.mxu0 0
    %450 = vmatprep.subr.bf16.mxu0 0
    %451 = vmatpush1.bf16.msra.mxu0 0
    %452 = vmatprep.subr.bf16.mxu0 0
    %453 = vmatpush1.bf16.msra.mxu0 0
    %454 = vmatprep.subr.bf16.mxu0 0
    %455 = vmatpush1.bf16.msra.mxu0 0
    %456 = vmatprep.subr.bf16.mxu0 0
    %457 = vmatpush1.bf16.msra.mxu0 0
    %458 = vmatprep.subr.bf16.mxu0 0
    %459 = vmatpush1.bf16.msra.mxu0 0
    %460 = vmatprep.mubr.bf16.mxu0 0
    %461 = vmatmul.mubr.bf16.gmra.mrb[0].mxu0 %v98
    %v462 = vpop.f32.mrb[0].mxu0
    %v463 = vadd.f32 0.0, %v462
    %v464 = vpop.f32.mrb[0].mxu0
    %v465 = vadd.f32 0.0, %v464
    %v466 = vpop.f32.mrb[0].mxu0
    %v467 = vpop.f32.mrb[0].mxu0
    %468 = vdwg.mxu0
    %469 = vmatprep.subr.bf16.mxu0 %v296
    %470 = vmatpush1.bf16.msra.mxu0 %v295
    %471 = vmatprep.subr.bf16.mxu0 %v302
    %472 = vmatpush1.bf16.msra.mxu0 %v301
    %473 = vmatprep.subr.bf16.mxu0 %v308
    %474 = vmatpush1.bf16.msra.mxu0 %v307
    %475 = vmatprep.subr.bf16.mxu0 %v314
    %476 = vmatpush1.bf16.msra.mxu0 %v313
    %477 = vmatprep.subr.bf16.mxu0 %v320
    %478 = vmatpush1.bf16.msra.mxu0 %v319
    %479 = vmatprep.subr.bf16.mxu0 %v326
    %480 = vmatpush1.bf16.msra.mxu0 %v325
    %481 = vmatprep.subr.bf16.mxu0 %v332
    %482 = vmatpush1.bf16.msra.mxu0 %v331
    %483 = vmatprep.subr.bf16.mxu0 %v338
    %484 = vmatpush1.bf16.msra.mxu0 %v337
    %485 = vmatprep.subr.bf16.mxu0 0
    %486 = vmatpush1.bf16.msra.mxu0 0
    %487 = vmatprep.subr.bf16.mxu0 0
    %488 = vmatpush1.bf16.msra.mxu0 0
    %489 = vmatprep.subr.bf16.mxu0 0
    %490 = vmatpush1.bf16.msra.mxu0 0
    %491 = vmatprep.subr.bf16.mxu0 0
    %492 = vmatpush1.bf16.msra.mxu0 0
    %493 = vmatprep.subr.bf16.mxu0 0
    %494 = vmatpush1.bf16.msra.mxu0 0
    %495 = vmatprep.subr.bf16.mxu0 0
    %496 = vmatpush1.bf16.msra.mxu0 0
    %497 = vmatprep.subr.bf16.mxu0 0
    %498 = vmatpush1.bf16.msra.mxu0 0
    %499 = vmatprep.subr.bf16.mxu0 0
    %500 = vmatpush1.bf16.msra.mxu0 0
    %501 = vmatprep.mubr.bf16.mxu0 0
    %502 = vmatmul.mubr.bf16.gmra.mrb[0].mxu0 %v98
    %v503 = vpop.f32.mrb[0].mxu0
    %v504 = vadd.f32 0.0, %v503
    %v505 = vpop.f32.mrb[0].mxu0
    %v506 = vadd.f32 0.0, %v505
    %v507 = vpop.f32.mrb[0].mxu0
    %v508 = vpop.f32.mrb[0].mxu0
    %509 = vdwg.mxu0
    %510 = vst [vmem:[#allocation2] sm:$0xff] %v422
    %511 = vst [vmem:[#allocation2 + $0x8] sm:$0xff] %v424
    %512 = vst [vmem:[#allocation2 + $0x10] sm:$0xff] %v463
    %513 = vst [vmem:[#allocation2 + $0x18] sm:$0xff] %v465
    %514 = vst [vmem:[#allocation2 + $0x20] sm:$0xff] %v504
    %515 = vst [vmem:[#allocation2 + $0x28] sm:$0xff] %v506
    %v516 = vld [vmem:[#allocation7] sm:$0xff]
    %v517 = vld [vmem:[#allocation7 + $0x8] sm:$0xff]
    %v518 = vld [vmem:[#allocation7 + $0x10] sm:$0xff]
    %v519 = vld [vmem:[#allocation7 + $0x18] sm:$0xff]
    %v520 = vld [vmem:[#allocation7 + $0x20] sm:$0xff]
    %v521 = vld [vmem:[#allocation7 + $0x28] sm:$0xff]
    %v522 = vld [vmem:[#allocation7 + $0x30] sm:$0xff]
    %v523 = vld [vmem:[#allocation7 + $0x38] sm:$0xff]
    %v524 = vld [vmem:[#allocation7 + $0x40] sm:$0xff]
    %v525 = vld [vmem:[#allocation7 + $0x48] sm:$0xff]
    %v526 = vld [vmem:[#allocation7 + $0x50] sm:$0xff]
    %v527 = vld [vmem:[#allocation7 + $0x58] sm:$0xff]
    %v528 = vld [vmem:[#allocation7 + $0x60] sm:$0xff]
    %v529 = vld [vmem:[#allocation7 + $0x68] sm:$0xff]
    %v530 = vld [vmem:[#allocation7 + $0x70] sm:$0xff]
    %v531 = vld [vmem:[#allocation7 + $0x78] sm:$0xff]
    %v532 = vld [vmem:[#allocation7 + $0x80] sm:$0xff]
    %v533 = vld [vmem:[#allocation7 + $0x88] sm:$0xff]
    %v534 = vld [vmem:[#allocation7 + $0x90] sm:$0xff]
    %v535 = vld [vmem:[#allocation7 + $0x98] sm:$0xff]
    %v536 = vld [vmem:[#allocation7 + $0xa0] sm:$0xff]
    %v537 = vld [vmem:[#allocation7 + $0xa8] sm:$0xff]
    %v538 = vld [vmem:[#allocation7 + $0xb0] sm:$0xff]
    %v539 = vld [vmem:[#allocation7 + $0xb8] sm:$0xff]
    %v540 = vld [vmem:[#allocation7 + $0xc0] sm:$0xff]
    %v541 = vld [vmem:[#allocation7 + $0xc8] sm:$0xff]
    %v542 = vld [vmem:[#allocation7 + $0xd0] sm:$0xff]
    %v543 = vld [vmem:[#allocation7 + $0xd8] sm:$0xff]
    %v544 = vld [vmem:[#allocation7 + $0xe0] sm:$0xff]
    %v545 = vld [vmem:[#allocation7 + $0xe8] sm:$0xff]
    %v546 = vld [vmem:[#allocation7 + $0xf0] sm:$0xff]
    %v547 = vld [vmem:[#allocation7 + $0xf8] sm:$0xff]
    %v548 = vld [vmem:[#allocation7 + $0x100] sm:$0xff]
    %v549 = vld [vmem:[#allocation7 + $0x108] sm:$0xff]
    %v550 = vld [vmem:[#allocation7 + $0x110] sm:$0xff]
    %v551 = vld [vmem:[#allocation7 + $0x118] sm:$0xff]
    %v552 = vld [vmem:[#allocation7 + $0x120] sm:$0xff]
    %v553 = vld [vmem:[#allocation7 + $0x128] sm:$0xff]
    %v554 = vld [vmem:[#allocation7 + $0x130] sm:$0xff]
    %v555 = vld [vmem:[#allocation7 + $0x138] sm:$0xff]
    %v556 = vld [vmem:[#allocation7 + $0x140] sm:$0xff]
    %v557 = vld [vmem:[#allocation7 + $0x148] sm:$0xff]
    %v558 = vld [vmem:[#allocation7 + $0x150] sm:$0xff]
    %v559 = vld [vmem:[#allocation7 + $0x158] sm:$0xff]
    %v560 = vld [vmem:[#allocation7 + $0x160] sm:$0xff]
    %v561 = vld [vmem:[#allocation7 + $0x168] sm:$0xff]
    %v562 = vld [vmem:[#allocation7 + $0x170] sm:$0xff]
    %v563 = vld [vmem:[#allocation7 + $0x178] sm:$0xff]
    %v564 = vld [vmem:[#allocation7 + $0x180] sm:$0xff]
    %v565 = vld [vmem:[#allocation7 + $0x188] sm:$0xff]
    %v566 = vld [vmem:[#allocation7 + $0x190] sm:$0xff]
    %v567 = vld [vmem:[#allocation7 + $0x198] sm:$0xff]
    %v568 = vld [vmem:[#allocation7 + $0x1a0] sm:$0xff]
    %v569 = vld [vmem:[#allocation7 + $0x1a8] sm:$0xff]
    %v570 = vld [vmem:[#allocation7 + $0x1b0] sm:$0xff]
    %v571 = vld [vmem:[#allocation7 + $0x1b8] sm:$0xff]
    %v572 = vld [vmem:[#allocation7 + $0x1c0] sm:$0xff]
    %v573 = vld [vmem:[#allocation7 + $0x1c8] sm:$0xff]
    %v574 = vld [vmem:[#allocation7 + $0x1d0] sm:$0xff]
    %v575 = vld [vmem:[#allocation7 + $0x1d8] sm:$0xff]
    %v576 = vld [vmem:[#allocation7 + $0x1e0] sm:$0xff]
    %v577 = vld [vmem:[#allocation7 + $0x1e8] sm:$0xff]
    %v578 = vld [vmem:[#allocation7 + $0x1f0] sm:$0xff]
    %v579 = vld [vmem:[#allocation7 + $0x1f8] sm:$0xff]
    %v580 = vld [vmem:[#allocation7 + $0x200] sm:$0xff]
    %v581 = vld [vmem:[#allocation7 + $0x208] sm:$0xff]
    %v582 = vld [vmem:[#allocation7 + $0x210] sm:$0xff]
    %v583 = vld [vmem:[#allocation7 + $0x218] sm:$0xff]
    %v584 = vld [vmem:[#allocation7 + $0x220] sm:$0xff]
    %v585 = vld [vmem:[#allocation7 + $0x228] sm:$0xff]
    %v586 = vld [vmem:[#allocation7 + $0x230] sm:$0xff]
    %v587 = vld [vmem:[#allocation7 + $0x238] sm:$0xff]
    %v588 = vld [vmem:[#allocation7 + $0x240] sm:$0xff]
    %v589 = vld [vmem:[#allocation7 + $0x248] sm:$0xff]
    %v590 = vld [vmem:[#allocation7 + $0x250] sm:$0xff]
    %v591 = vld [vmem:[#allocation7 + $0x258] sm:$0xff]
    %v592 = vld [vmem:[#allocation7 + $0x260] sm:$0xff]
    %v593 = vld [vmem:[#allocation7 + $0x268] sm:$0xff]
    %v594 = vld [vmem:[#allocation7 + $0x270] sm:$0xff]
    %v595 = vld [vmem:[#allocation7 + $0x278] sm:$0xff]
    %v596 = vld [vmem:[#allocation7 + $0x280] sm:$0xff]
    %v597 = vld [vmem:[#allocation7 + $0x288] sm:$0xff]
    %v598 = vld [vmem:[#allocation7 + $0x290] sm:$0xff]
    %v599 = vld [vmem:[#allocation7 + $0x298] sm:$0xff]
    %v600 = vld [vmem:[#allocation7 + $0x2a0] sm:$0xff]
    %v601 = vld [vmem:[#allocation7 + $0x2a8] sm:$0xff]
    %v602 = vld [vmem:[#allocation7 + $0x2b0] sm:$0xff]
    %v603 = vld [vmem:[#allocation7 + $0x2b8] sm:$0xff]
    %v604 = vld [vmem:[#allocation7 + $0x2c0] sm:$0xff]
    %v605 = vld [vmem:[#allocation7 + $0x2c8] sm:$0xff]
    %v606 = vld [vmem:[#allocation7 + $0x2d0] sm:$0xff]
    %v607 = vld [vmem:[#allocation7 + $0x2d8] sm:$0xff]
    %v608 = vld [vmem:[#allocation7 + $0x2e0] sm:$0xff]
    %v609 = vld [vmem:[#allocation7 + $0x2e8] sm:$0xff]
    %v610 = vld [vmem:[#allocation7 + $0x2f0] sm:$0xff]
    %v611 = vld [vmem:[#allocation7 + $0x2f8] sm:$0xff]
    %v612 = vld [vmem:[%s5] sm:$0xf]
    %v613 = vld [vmem:[%s6] sm:$0x3]
    %v614 = vld [vmem:[%s7] sm:$0x3]
    %v615 = vld [vmem:[%s1] sm:$0xff]
    %v616 = vld [vmem:[%s1 + $0x8] sm:$0xff]
    %v617 = vld [vmem:[#allocation2] sm:$0xff]
    %v618 = vld [vmem:[#allocation2 + $0x8] sm:$0xff]
    %v619 = vld [vmem:[#allocation2 + $0x10] sm:$0xff]
    %v620 = vld [vmem:[#allocation2 + $0x18] sm:$0xff]
    %v621 = vld [vmem:[#allocation2 + $0x20] sm:$0xff]
    %v622 = vld [vmem:[#allocation2 + $0x28] sm:$0xff]
    %v623 = vpack.c.bf16 %v615, %v615
    %v624 = vpack.c.bf16 %v616, %v616
    %v721 = vunpack.c.l.b16 %v516
    %v722 = vunpack.c.h.b16 %v516
    %v723 = vunpack.c.l.b16 %v517
    %v724 = vunpack.c.h.b16 %v517
    %v725 = vunpack.c.l.b16 %v518
    %v726 = vunpack.c.h.b16 %v518
    %v727 = vunpack.c.l.b16 %v519
    %v728 = vunpack.c.h.b16 %v519
    %v729 = vunpack.c.l.b16 %v520
    %v730 = vunpack.c.h.b16 %v520
    %v731 = vunpack.c.l.b16 %v521
    %v732 = vunpack.c.h.b16 %v521
    %v733 = vunpack.c.l.b16 %v522
    %v734 = vunpack.c.h.b16 %v522
    %v735 = vunpack.c.l.b16 %v523
    %v736 = vunpack.c.h.b16 %v523
    %v737 = vunpack.c.l.b16 %v524
    %v738 = vunpack.c.h.b16 %v524
    %v739 = vunpack.c.l.b16 %v525
    %v740 = vunpack.c.h.b16 %v525
    %v741 = vunpack.c.l.b16 %v526
    %v742 = vunpack.c.h.b16 %v526
    %v743 = vunpack.c.l.b16 %v527
    %v744 = vunpack.c.h.b16 %v527
    %v745 = vunpack.c.l.b16 %v528
    %v746 = vunpack.c.h.b16 %v528
    %v747 = vunpack.c.l.b16 %v529
    %v748 = vunpack.c.h.b16 %v529
    %v749 = vunpack.c.l.b16 %v530
    %v750 = vunpack.c.h.b16 %v530
    %v751 = vunpack.c.l.b16 %v531
    %v752 = vunpack.c.h.b16 %v531
    %v753 = vunpack.c.l.b16 %v532
    %v754 = vunpack.c.h.b16 %v532
    %v755 = vunpack.c.l.b16 %v533
    %v756 = vunpack.c.h.b16 %v533
    %v757 = vunpack.c.l.b16 %v534
    %v758 = vunpack.c.h.b16 %v534
    %v759 = vunpack.c.l.b16 %v535
    %v760 = vunpack.c.h.b16 %v535
    %v761 = vunpack.c.l.b16 %v536
    %v762 = vunpack.c.h.b16 %v536
    %v763 = vunpack.c.l.b16 %v537
    %v764 = vunpack.c.h.b16 %v537
    %v765 = vunpack.c.l.b16 %v538
    %v766 = vunpack.c.h.b16 %v538
    %v767 = vunpack.c.l.b16 %v539
    %v768 = vunpack.c.h.b16 %v539
    %v769 = vunpack.c.l.b16 %v540
    %v770 = vunpack.c.h.b16 %v540
    %v771 = vunpack.c.l.b16 %v541
    %v772 = vunpack.c.h.b16 %v541
    %v773 = vunpack.c.l.b16 %v542
    %v774 = vunpack.c.h.b16 %v542
    %v775 = vunpack.c.l.b16 %v543
    %v776 = vunpack.c.h.b16 %v543
    %v777 = vunpack.c.l.b16 %v544
    %v778 = vunpack.c.h.b16 %v544
    %v779 = vunpack.c.l.b16 %v545
    %v780 = vunpack.c.h.b16 %v545
    %v781 = vunpack.c.l.b16 %v546
    %v782 = vunpack.c.h.b16 %v546
    %v783 = vunpack.c.l.b16 %v547
    %v784 = vunpack.c.h.b16 %v547
    %v785 = vunpack.c.l.b16 %v548
    %v786 = vunpack.c.h.b16 %v548
    %v787 = vunpack.c.l.b16 %v549
    %v788 = vunpack.c.h.b16 %v549
    %v789 = vunpack.c.l.b16 %v550
    %v790 = vunpack.c.h.b16 %v550
    %v791 = vunpack.c.l.b16 %v551
    %v792 = vunpack.c.h.b16 %v551
    %v793 = vunpack.c.l.b16 %v552
    %v794 = vunpack.c.h.b16 %v552
    %v795 = vunpack.c.l.b16 %v553
    %v796 = vunpack.c.h.b16 %v553
    %v797 = vunpack.c.l.b16 %v554
    %v798 = vunpack.c.h.b16 %v554
    %v799 = vunpack.c.l.b16 %v555
    %v800 = vunpack.c.h.b16 %v555
    %v801 = vunpack.c.l.b16 %v556
    %v802 = vunpack.c.h.b16 %v556
    %v803 = vunpack.c.l.b16 %v557
    %v804 = vunpack.c.h.b16 %v557
    %v805 = vunpack.c.l.b16 %v558
    %v806 = vunpack.c.h.b16 %v558
    %v807 = vunpack.c.l.b16 %v559
    %v808 = vunpack.c.h.b16 %v559
    %v809 = vunpack.c.l.b16 %v560
    %v810 = vunpack.c.h.b16 %v560
    %v811 = vunpack.c.l.b16 %v561
    %v812 = vunpack.c.h.b16 %v561
    %v813 = vunpack.c.l.b16 %v562
    %v814 = vunpack.c.h.b16 %v562
    %v815 = vunpack.c.l.b16 %v563
    %v816 = vunpack.c.h.b16 %v563
    %v817 = vunpack.c.l.b16 %v564
    %v818 = vunpack.c.h.b16 %v564
    %v819 = vunpack.c.l.b16 %v565
    %v820 = vunpack.c.h.b16 %v565
    %v821 = vunpack.c.l.b16 %v566
    %v822 = vunpack.c.h.b16 %v566
    %v823 = vunpack.c.l.b16 %v567
    %v824 = vunpack.c.h.b16 %v567
    %v825 = vunpack.c.l.b16 %v568
    %v826 = vunpack.c.h.b16 %v568
    %v827 = vunpack.c.l.b16 %v569
    %v828 = vunpack.c.h.b16 %v569
    %v829 = vunpack.c.l.b16 %v570
    %v830 = vunpack.c.h.b16 %v570
    %v831 = vunpack.c.l.b16 %v571
    %v832 = vunpack.c.h.b16 %v571
    %v833 = vunpack.c.l.b16 %v572
    %v834 = vunpack.c.h.b16 %v572
    %v835 = vunpack.c.l.b16 %v573
    %v836 = vunpack.c.h.b16 %v573
    %v837 = vunpack.c.l.b16 %v574
    %v838 = vunpack.c.h.b16 %v574
    %v839 = vunpack.c.l.b16 %v575
    %v840 = vunpack.c.h.b16 %v575
    %v841 = vunpack.c.l.b16 %v576
    %v842 = vunpack.c.h.b16 %v576
    %v843 = vunpack.c.l.b16 %v577
    %v844 = vunpack.c.h.b16 %v577
    %v845 = vunpack.c.l.b16 %v578
    %v846 = vunpack.c.h.b16 %v578
    %v847 = vunpack.c.l.b16 %v579
    %v848 = vunpack.c.h.b16 %v579
    %v849 = vunpack.c.l.b16 %v580
    %v850 = vunpack.c.h.b16 %v580
    %v851 = vunpack.c.l.b16 %v581
    %v852 = vunpack.c.h.b16 %v581
    %v853 = vunpack.c.l.b16 %v582
    %v854 = vunpack.c.h.b16 %v582
    %v855 = vunpack.c.l.b16 %v583
    %v856 = vunpack.c.h.b16 %v583
    %v857 = vunpack.c.l.b16 %v584
    %v858 = vunpack.c.h.b16 %v584
    %v859 = vunpack.c.l.b16 %v585
    %v860 = vunpack.c.h.b16 %v585
    %v861 = vunpack.c.l.b16 %v586
    %v862 = vunpack.c.h.b16 %v586
    %v863 = vunpack.c.l.b16 %v587
    %v864 = vunpack.c.h.b16 %v587
    %v865 = vunpack.c.l.b16 %v588
    %v866 = vunpack.c.h.b16 %v588
    %v867 = vunpack.c.l.b16 %v589
    %v868 = vunpack.c.h.b16 %v589
    %v869 = vunpack.c.l.b16 %v590
    %v870 = vunpack.c.h.b16 %v590
    %v871 = vunpack.c.l.b16 %v591
    %v872 = vunpack.c.h.b16 %v591
    %v873 = vunpack.c.l.b16 %v592
    %v874 = vunpack.c.h.b16 %v592
    %v875 = vunpack.c.l.b16 %v593
    %v876 = vunpack.c.h.b16 %v593
    %v877 = vunpack.c.l.b16 %v594
    %v878 = vunpack.c.h.b16 %v594
    %v879 = vunpack.c.l.b16 %v595
    %v880 = vunpack.c.h.b16 %v595
    %v881 = vunpack.c.l.b16 %v596
    %v882 = vunpack.c.h.b16 %v596
    %v883 = vunpack.c.l.b16 %v597
    %v884 = vunpack.c.h.b16 %v597
    %v885 = vunpack.c.l.b16 %v598
    %v886 = vunpack.c.h.b16 %v598
    %v887 = vunpack.c.l.b16 %v599
    %v888 = vunpack.c.h.b16 %v599
    %v889 = vunpack.c.l.b16 %v600
    %v890 = vunpack.c.h.b16 %v600
    %v891 = vunpack.c.l.b16 %v601
    %v892 = vunpack.c.h.b16 %v601
    %v893 = vunpack.c.l.b16 %v602
    %v894 = vunpack.c.h.b16 %v602
    %v895 = vunpack.c.l.b16 %v603
    %v896 = vunpack.c.h.b16 %v603
    %v897 = vunpack.c.l.b16 %v604
    %v898 = vunpack.c.h.b16 %v604
    %v899 = vunpack.c.l.b16 %v605
    %v900 = vunpack.c.h.b16 %v605
    %v901 = vunpack.c.l.b16 %v606
    %v902 = vunpack.c.h.b16 %v606
    %v903 = vunpack.c.l.b16 %v607
    %v904 = vunpack.c.h.b16 %v607
    %v905 = vunpack.c.l.b16 %v608
    %v906 = vunpack.c.h.b16 %v608
    %v907 = vunpack.c.l.b16 %v609
    %v908 = vunpack.c.h.b16 %v609
    %v909 = vunpack.c.l.b16 %v610
    %v910 = vunpack.c.h.b16 %v610
    %v911 = vunpack.c.l.b16 %v611
    %v912 = vunpack.c.h.b16 %v611
    %v913 = vpack.c.b16 %v727, %v721
    %v914 = vpack.c.b16 %v728, %v722
    %v915 = vpack.c.b16 %v729, %v723
    %v916 = vpack.c.b16 %v730, %v724
    %v917 = vpack.c.b16 %v731, %v725
    %v918 = vpack.c.b16 %v732, %v726
    %v919 = vpack.c.b16 %v739, %v733
    %v920 = vpack.c.b16 %v740, %v734
    %v921 = vpack.c.b16 %v741, %v735
    %v922 = vpack.c.b16 %v742, %v736
    %v923 = vpack.c.b16 %v743, %v737
    %v924 = vpack.c.b16 %v744, %v738
    %v925 = vpack.c.b16 %v751, %v745
    %v926 = vpack.c.b16 %v752, %v746
    %v927 = vpack.c.b16 %v753, %v747
    %v928 = vpack.c.b16 %v754, %v748
    %v929 = vpack.c.b16 %v755, %v749
    %v930 = vpack.c.b16 %v756, %v750
    %v931 = vpack.c.b16 %v763, %v757
    %v932 = vpack.c.b16 %v764, %v758
    %v933 = vpack.c.b16 %v765, %v759
    %v934 = vpack.c.b16 %v766, %v760
    %v935 = vpack.c.b16 %v767, %v761
    %v936 = vpack.c.b16 %v768, %v762
    %v937 = vpack.c.b16 %v775, %v769
    %v938 = vpack.c.b16 %v776, %v770
    %v939 = vpack.c.b16 %v777, %v771
    %v940 = vpack.c.b16 %v778, %v772
    %v941 = vpack.c.b16 %v779, %v773
    %v942 = vpack.c.b16 %v780, %v774
    %v943 = vpack.c.b16 %v787, %v781
    %v944 = vpack.c.b16 %v788, %v782
    %v945 = vpack.c.b16 %v789, %v783
    %v946 = vpack.c.b16 %v790, %v784
    %v947 = vpack.c.b16 %v791, %v785
    %v948 = vpack.c.b16 %v792, %v786
    %v949 = vpack.c.b16 %v799, %v793
    %v950 = vpack.c.b16 %v800, %v794
    %v951 = vpack.c.b16 %v801, %v795
    %v952 = vpack.c.b16 %v802, %v796
    %v953 = vpack.c.b16 %v803, %v797
    %v954 = vpack.c.b16 %v804, %v798
    %v955 = vpack.c.b16 %v811, %v805
    %v956 = vpack.c.b16 %v812, %v806
    %v957 = vpack.c.b16 %v813, %v807
    %v958 = vpack.c.b16 %v814, %v808
    %v959 = vpack.c.b16 %v815, %v809
    %v960 = vpack.c.b16 %v816, %v810
    %v961 = vpack.c.b16 %v823, %v817
    %v962 = vpack.c.b16 %v824, %v818
    %v963 = vpack.c.b16 %v825, %v819
    %v964 = vpack.c.b16 %v826, %v820
    %v965 = vpack.c.b16 %v827, %v821
    %v966 = vpack.c.b16 %v828, %v822
    %v967 = vpack.c.b16 %v835, %v829
    %v968 = vpack.c.b16 %v836, %v830
    %v969 = vpack.c.b16 %v837, %v831
    %v970 = vpack.c.b16 %v838, %v832
    %v971 = vpack.c.b16 %v839, %v833
    %v972 = vpack.c.b16 %v840, %v834
    %v973 = vpack.c.b16 %v847, %v841
    %v974 = vpack.c.b16 %v848, %v842
    %v975 = vpack.c.b16 %v849, %v843
    %v976 = vpack.c.b16 %v850, %v844
    %v977 = vpack.c.b16 %v851, %v845
    %v978 = vpack.c.b16 %v852, %v846
    %v979 = vpack.c.b16 %v859, %v853
    %v980 = vpack.c.b16 %v860, %v854
    %v981 = vpack.c.b16 %v861, %v855
    %v982 = vpack.c.b16 %v862, %v856
    %v983 = vpack.c.b16 %v863, %v857
    %v984 = vpack.c.b16 %v864, %v858
    %v985 = vpack.c.b16 %v871, %v865
    %v986 = vpack.c.b16 %v872, %v866
    %v987 = vpack.c.b16 %v873, %v867
    %v988 = vpack.c.b16 %v874, %v868
    %v989 = vpack.c.b16 %v875, %v869
    %v990 = vpack.c.b16 %v876, %v870
    %v991 = vpack.c.b16 %v883, %v877
    %v992 = vpack.c.b16 %v884, %v878
    %v993 = vpack.c.b16 %v885, %v879
    %v994 = vpack.c.b16 %v886, %v880
    %v995 = vpack.c.b16 %v887, %v881
    %v996 = vpack.c.b16 %v888, %v882
    %v997 = vpack.c.b16 %v895, %v889
    %v998 = vpack.c.b16 %v896, %v890
    %v999 = vpack.c.b16 %v897, %v891
    %v1000 = vpack.c.b16 %v898, %v892
    %v1001 = vpack.c.b16 %v899, %v893
    %v1002 = vpack.c.b16 %v900, %v894
    %v1003 = vpack.c.b16 %v907, %v901
    %v1004 = vpack.c.b16 %v908, %v902
    %v1005 = vpack.c.b16 %v909, %v903
    %v1006 = vpack.c.b16 %v910, %v904
    %v1007 = vpack.c.b16 %v911, %v905
    %v1008 = vpack.c.b16 %v912, %v906
    %1105 = vmatprep.subr.bf16.mxu0 %v914
    %1106 = vmatpush1.bf16.msra.mxu0 %v913
    %1107 = vmatprep.subr.bf16.mxu0 %v920
    %1108 = vmatpush1.bf16.msra.mxu0 %v919
    %1109 = vmatprep.subr.bf16.mxu0 %v926
    %1110 = vmatpush1.bf16.msra.mxu0 %v925
    %1111 = vmatprep.subr.bf16.mxu0 %v932
    %1112 = vmatpush1.bf16.msra.mxu0 %v931
    %1113 = vmatprep.subr.bf16.mxu0 %v938
    %1114 = vmatpush1.bf16.msra.mxu0 %v937
    %1115 = vmatprep.subr.bf16.mxu0 %v944
    %1116 = vmatpush1.bf16.msra.mxu0 %v943
    %1117 = vmatprep.subr.bf16.mxu0 %v950
    %1118 = vmatpush1.bf16.msra.mxu0 %v949
    %1119 = vmatprep.subr.bf16.mxu0 %v956
    %1120 = vmatpush1.bf16.msra.mxu0 %v955
    %1121 = vmatprep.subr.bf16.mxu0 %v962
    %1122 = vmatpush1.bf16.msra.mxu0 %v961
    %1123 = vmatprep.subr.bf16.mxu0 %v968
    %1124 = vmatpush1.bf16.msra.mxu0 %v967
    %1125 = vmatprep.subr.bf16.mxu0 %v974
    %1126 = vmatpush1.bf16.msra.mxu0 %v973
    %1127 = vmatprep.subr.bf16.mxu0 %v980
    %1128 = vmatpush1.bf16.msra.mxu0 %v979
    %1129 = vmatprep.subr.bf16.mxu0 %v986
    %1130 = vmatpush1.bf16.msra.mxu0 %v985
    %1131 = vmatprep.subr.bf16.mxu0 %v992
    %1132 = vmatpush1.bf16.msra.mxu0 %v991
    %1133 = vmatprep.subr.bf16.mxu0 %v998
    %1134 = vmatpush1.bf16.msra.mxu0 %v997
    %1135 = vmatprep.subr.bf16.mxu0 %v1004
    %1136 = vmatpush1.bf16.msra.mxu0 %v1003
    %1137 = vmatprep.mubr.bf16.mxu0 %v624
    %1138 = vmatmul.mubr.bf16.gmra.mrb[0].mxu0 %v623
    %v1139 = vpop.f32.mrb[0].mxu0
    %v1140 = vadd.f32 0.0, %v1139
    %v1141 = vpop.f32.mrb[0].mxu0
    %v1142 = vadd.f32 0.0, %v1141
    %v1143 = vpop.f32.mrb[0].mxu0
    %v1144 = vpop.f32.mrb[0].mxu0
    %1145 = vdwg.mxu0
    %1146 = vmatprep.subr.bf16.mxu0 %v916
    %1147 = vmatpush1.bf16.msra.mxu0 %v915
    %1148 = vmatprep.subr.bf16.mxu0 %v922
    %1149 = vmatpush1.bf16.msra.mxu0 %v921
    %1150 = vmatprep.subr.bf16.mxu0 %v928
    %1151 = vmatpush1.bf16.msra.mxu0 %v927
    %1152 = vmatprep.subr.bf16.mxu0 %v934
    %1153 = vmatpush1.bf16.msra.mxu0 %v933
    %1154 = vmatprep.subr.bf16.mxu0 %v940
    %1155 = vmatpush1.bf16.msra.mxu0 %v939
    %1156 = vmatprep.subr.bf16.mxu0 %v946
    %1157 = vmatpush1.bf16.msra.mxu0 %v945
    %1158 = vmatprep.subr.bf16.mxu0 %v952
    %1159 = vmatpush1.bf16.msra.mxu0 %v951
    %1160 = vmatprep.subr.bf16.mxu0 %v958
    %1161 = vmatpush1.bf16.msra.mxu0 %v957
    %1162 = vmatprep.subr.bf16.mxu0 %v964
    %1163 = vmatpush1.bf16.msra.mxu0 %v963
    %1164 = vmatprep.subr.bf16.mxu0 %v970
    %1165 = vmatpush1.bf16.msra.mxu0 %v969
    %1166 = vmatprep.subr.bf16.mxu0 %v976
    %1167 = vmatpush1.bf16.msra.mxu0 %v975
    %1168 = vmatprep.subr.bf16.mxu0 %v982
    %1169 = vmatpush1.bf16.msra.mxu0 %v981
    %1170 = vmatprep.subr.bf16.mxu0 %v988
    %1171 = vmatpush1.bf16.msra.mxu0 %v987
    %1172 = vmatprep.subr.bf16.mxu0 %v994
    %1173 = vmatpush1.bf16.msra.mxu0 %v993
    %1174 = vmatprep.subr.bf16.mxu0 %v1000
    %1175 = vmatpush1.bf16.msra.mxu0 %v999
    %1176 = vmatprep.subr.bf16.mxu0 %v1006
    %1177 = vmatpush1.bf16.msra.mxu0 %v1005
    %1178 = vmatprep.mubr.bf16.mxu0 %v624
    %1179 = vmatmul.mubr.bf16.gmra.mrb[0].mxu0 %v623
    %v1180 = vpop.f32.mrb[0].mxu0
    %v1181 = vadd.f32 0.0, %v1180
    %v1182 = vpop.f32.mrb[0].mxu0
    %v1183 = vadd.f32 0.0, %v1182
    %v1184 = vpop.f32.mrb[0].mxu0
    %v1185 = vpop.f32.mrb[0].mxu0
    %1186 = vdwg.mxu0
    %1187 = vmatprep.subr.bf16.mxu0 %v918
    %1188 = vmatpush1.bf16.msra.mxu0 %v917
    %1189 = vmatprep.subr.bf16.mxu0 %v924
    %1190 = vmatpush1.bf16.msra.mxu0 %v923
    %1191 = vmatprep.subr.bf16.mxu0 %v930
    %1192 = vmatpush1.bf16.msra.mxu0 %v929
    %1193 = vmatprep.subr.bf16.mxu0 %v936
    %1194 = vmatpush1.bf16.msra.mxu0 %v935
    %1195 = vmatprep.subr.bf16.mxu0 %v942
    %1196 = vmatpush1.bf16.msra.mxu0 %v941
    %1197 = vmatprep.subr.bf16.mxu0 %v948
    %1198 = vmatpush1.bf16.msra.mxu0 %v947
    %1199 = vmatprep.subr.bf16.mxu0 %v954
    %1200 = vmatpush1.bf16.msra.mxu0 %v953
    %1201 = vmatprep.subr.bf16.mxu0 %v960
    %1202 = vmatpush1.bf16.msra.mxu0 %v959
    %1203 = vmatprep.subr.bf16.mxu0 %v966
    %1204 = vmatpush1.bf16.msra.mxu0 %v965
    %1205 = vmatprep.subr.bf16.mxu0 %v972
    %1206 = vmatpush1.bf16.msra.mxu0 %v971
    %1207 = vmatprep.subr.bf16.mxu0 %v978
    %1208 = vmatpush1.bf16.msra.mxu0 %v977
    %1209 = vmatprep.subr.bf16.mxu0 %v984
    %1210 = vmatpush1.bf16.msra.mxu0 %v983
    %1211 = vmatprep.subr.bf16.mxu0 %v990
    %1212 = vmatpush1.bf16.msra.mxu0 %v989
    %1213 = vmatprep.subr.bf16.mxu0 %v996
    %1214 = vmatpush1.bf16.msra.mxu0 %v995
    %1215 = vmatprep.subr.bf16.mxu0 %v1002
    %1216 = vmatpush1.bf16.msra.mxu0 %v1001
    %1217 = vmatprep.subr.bf16.mxu0 %v1008
    %1218 = vmatpush1.bf16.msra.mxu0 %v1007
    %1219 = vmatprep.mubr.bf16.mxu0 %v624
    %1220 = vmatmul.mubr.bf16.gmra.mrb[0].mxu0 %v623
    %v1221 = vpop.f32.mrb[0].mxu0
    %v1222 = vadd.f32 0.0, %v1221
    %v1223 = vpop.f32.mrb[0].mxu0
    %v1224 = vadd.f32 0.0, %v1223
    %v1225 = vpop.f32.mrb[0].mxu0
    %v1226 = vpop.f32.mrb[0].mxu0
    %1227 = vdwg.mxu0
    %v1228 = vadd.f32 %v617, %v1140
    %v1229 = vadd.f32 %v618, %v1142
    %v1230 = vadd.f32 %v619, %v1181
    %v1231 = vadd.f32 %v620, %v1183
    %v1233 = vlaneseq
    %v1234 = vshrl.u32 %v1233, 7
    %v1235 = vsub.s32 0, %v1234
    %v1236 = vrot.slane %v612, %v1235
    %v1237 = vlaneseq
    %v1238 = vshrl.u32 %v1237, 7
    %v1239 = vsub.s32 1, %v1238
    %v1240 = vrot.slane %v612, %v1239
    %v1241 = vlaneseq
    %v1242 = vshrl.u32 %v1241, 7
    %v1243 = vsub.s32 2, %v1242
    %v1244 = vrot.slane %v612, %v1243
    %v1245 = vlaneseq
    %v1246 = vshrl.u32 %v1245, 7
    %v1247 = vsub.s32 3, %v1246
    %v1248 = vrot.slane %v612, %v1247
    %v1253 = vadd.f32 %v1228, %v1236
    %v1254 = vadd.f32 %v1229, %v1240
    %v1255 = vadd.f32 %v1230, %v1244
    %v1256 = vadd.f32 %v1231, %v1248
    %v1257 = vxor.u32 %v1253, 2147483648
    %v1258 = vxor.u32 %v1254, 2147483648
    %v1259 = vxor.u32 %v1255, 2147483648
    %v1260 = vxor.u32 %v1256, 2147483648
    %v1261 = vmul.f32 %v1257, 1.442695
    %v1262 = vpow.pop %v1261
    %v1263 = vmul.f32 %v1258, 1.442695
    %v1264 = vpow.pop %v1263
    %v1265 = vmul.f32 %v1259, 1.442695
    %v1266 = vpow.pop %v1265
    %v1267 = vmul.f32 %v1260, 1.442695
    %v1268 = vpow.pop %v1267
    %v1269 = vadd.f32 %v1262, 1.0
    %v1270 = vadd.f32 %v1264, 1.0
    %v1271 = vadd.f32 %v1266, 1.0
    %v1272 = vadd.f32 %v1268, 1.0
    %v1273 = vrcp.pop %v1269
    %v1274 = vmul.f32 1.0, %v1273
    %v1275 = vrcp.pop %v1270
    %v1276 = vmul.f32 1.0, %v1275
    %v1277 = vrcp.pop %v1271
    %v1278 = vmul.f32 1.0, %v1277
    %v1279 = vrcp.pop %v1272
    %v1280 = vmul.f32 1.0, %v1279
    %v1282 = vlaneseq
    %v1283 = vshrl.u32 %v1282, 7
    %v1284 = vsub.s32 0, %v1283
    %v1285 = vrot.slane %v613, %v1284
    %v1286 = vlaneseq
    %v1287 = vshrl.u32 %v1286, 7
    %v1288 = vsub.s32 1, %v1287
    %v1289 = vrot.slane %v613, %v1288
    %v1292 = vadd.f32 %v621, %v1285
    %v1293 = vadd.f32 %v622, %v1289
    %v1295 = vlaneseq
    %v1296 = vshrl.u32 %v1295, 7
    %v1297 = vsub.s32 0, %v1296
    %v1298 = vrot.slane %v614, %v1297
    %v1299 = vlaneseq
    %v1300 = vshrl.u32 %v1299, 7
    %v1301 = vsub.s32 1, %v1300
    %v1302 = vrot.slane %v614, %v1301
    %v1305 = vadd.f32 %v1222, %v1298
    %v1306 = vadd.f32 %v1224, %v1302
    %v1307 = vmul.f32 %v1274, %v1305
    %v1308 = vmul.f32 %v1276, %v1306
    %v1309 = vadd.f32 %v1292, %v1307
    %v1310 = vadd.f32 %v1293, %v1308
    %v1311 = vtanh.pop %v1309
    %v1312 = vtanh.pop %v1310
    %v1313 = vsub.f32 1.0, %v1278
    %v1314 = vsub.f32 1.0, %v1280
    %v1315 = vmul.f32 %v1313, %v1311
    %v1316 = vmul.f32 %v1314, %v1312
    %v1317 = vmul.f32 %v1278, %v615
    %v1318 = vmul.f32 %v1280, %v616
    %v1319 = vadd.f32 %v1315, %v1317
    %v1320 = vadd.f32 %v1316, %v1318
    %1321 = vst [vmem:[#allocation3] sm:$0xff] %v1319
    %1322 = vst [vmem:[#allocation3 + $0x8] sm:$0xff] %v1320
    %1323 = vst [vmem:[#allocation12] sm:$0xff] %v1319
    %1324 = vst [vmem:[#allocation12 + $0x8] sm:$0xff] %v1320
    %v1325 = vld [vmem:[#allocation3] sm:$0xff]
    %v1326 = vld [vmem:[#allocation3 + $0x8] sm:$0xff]
    %v1327 = vmax.f32 %v1325, 0.0
    %v1328 = vmax.f32 %v1326, 0.0
    %v1329 = vpack.c.bf16 %v1327, %v1327
    %v1330 = vpack.c.bf16 %v1328, %v1328
    %v1331 = vld [vmem:[#allocation9] sm:$0xff]
    %v1332 = vld [vmem:[#allocation9 + $0x8] sm:$0xff]
    %v1333 = vld [vmem:[#allocation9 + $0x10] sm:$0xff]
    %v1334 = vld [vmem:[#allocation9 + $0x18] sm:$0xff]
    %v1335 = vld [vmem:[#allocation9 + $0x20] sm:$0xff]
    %v1336 = vld [vmem:[#allocation9 + $0x28] sm:$0xff]
    %v1337 = vld [vmem:[#allocation9 + $0x30] sm:$0xff]
    %v1338 = vld [vmem:[#allocation9 + $0x38] sm:$0xff]
    %v1339 = vld [vmem:[#allocation9 + $0x40] sm:$0xff]
    %v1340 = vld [vmem:[#allocation9 + $0x48] sm:$0xff]
    %v1341 = vld [vmem:[#allocation9 + $0x50] sm:$0xff]
    %v1342 = vld [vmem:[#allocation9 + $0x58] sm:$0xff]
    %v1343 = vld [vmem:[#allocation9 + $0x60] sm:$0xff]
    %v1344 = vld [vmem:[#allocation9 + $0x68] sm:$0xff]
    %v1345 = vld [vmem:[#allocation9 + $0x70] sm:$0xff]
    %v1346 = vld [vmem:[#allocation9 + $0x78] sm:$0xff]
    %v1347 = vld [vmem:[#allocation9 + $0x80] sm:$0xff]
    %v1348 = vld [vmem:[#allocation9 + $0x88] sm:$0xff]
    %v1349 = vld [vmem:[#allocation9 + $0x90] sm:$0xff]
    %v1350 = vld [vmem:[#allocation9 + $0x98] sm:$0xff]
    %v1351 = vld [vmem:[#allocation9 + $0xa0] sm:$0xff]
    %v1352 = vld [vmem:[#allocation9 + $0xa8] sm:$0xff]
    %v1353 = vld [vmem:[#allocation9 + $0xb0] sm:$0xff]
    %v1354 = vld [vmem:[#allocation9 + $0xb8] sm:$0xff]
    %v1355 = vld [vmem:[#allocation9 + $0xc0] sm:$0xff]
    %v1356 = vld [vmem:[#allocation9 + $0xc8] sm:$0xff]
    %v1357 = vld [vmem:[#allocation9 + $0xd0] sm:$0xff]
    %v1358 = vld [vmem:[#allocation9 + $0xd8] sm:$0xff]
    %v1359 = vld [vmem:[#allocation9 + $0xe0] sm:$0xff]
    %v1360 = vld [vmem:[#allocation9 + $0xe8] sm:$0xff]
    %v1361 = vld [vmem:[#allocation9 + $0xf0] sm:$0xff]
    %v1362 = vld [vmem:[#allocation9 + $0xf8] sm:$0xff]
    %v1363 = vld [vmem:[#allocation10] sm:$0x3]
    %v1365 = vlaneseq
    %v1366 = vshrl.u32 %v1365, 7
    %v1367 = vsub.s32 0, %v1366
    %v1368 = vrot.slane %v1363, %v1367
    %v1369 = vlaneseq
    %v1370 = vshrl.u32 %v1369, 7
    %v1371 = vsub.s32 1, %v1370
    %v1372 = vrot.slane %v1363, %v1371
    %v1407 = vunpack.c.l.b16 %v1331
    %v1408 = vunpack.c.h.b16 %v1331
    %v1409 = vunpack.c.l.b16 %v1332
    %v1410 = vunpack.c.h.b16 %v1332
    %v1411 = vunpack.c.l.b16 %v1333
    %v1412 = vunpack.c.h.b16 %v1333
    %v1413 = vunpack.c.l.b16 %v1334
    %v1414 = vunpack.c.h.b16 %v1334
    %v1415 = vunpack.c.l.b16 %v1335
    %v1416 = vunpack.c.h.b16 %v1335
    %v1417 = vunpack.c.l.b16 %v1336
    %v1418 = vunpack.c.h.b16 %v1336
    %v1419 = vunpack.c.l.b16 %v1337
    %v1420 = vunpack.c.h.b16 %v1337
    %v1421 = vunpack.c.l.b16 %v1338
    %v1422 = vunpack.c.h.b16 %v1338
    %v1423 = vunpack.c.l.b16 %v1339
    %v1424 = vunpack.c.h.b16 %v1339
    %v1425 = vunpack.c.l.b16 %v1340
    %v1426 = vunpack.c.h.b16 %v1340
    %v1427 = vunpack.c.l.b16 %v1341
    %v1428 = vunpack.c.h.b16 %v1341
    %v1429 = vunpack.c.l.b16 %v1342
    %v1430 = vunpack.c.h.b16 %v1342
    %v1431 = vunpack.c.l.b16 %v1343
    %v1432 = vunpack.c.h.b16 %v1343
    %v1433 = vunpack.c.l.b16 %v1344
    %v1434 = vunpack.c.h.b16 %v1344
    %v1435 = vunpack.c.l.b16 %v1345
    %v1436 = vunpack.c.h.b16 %v1345
    %v1437 = vunpack.c.l.b16 %v1346
    %v1438 = vunpack.c.h.b16 %v1346
    %v1439 = vunpack.c.l.b16 %v1347
    %v1440 = vunpack.c.h.b16 %v1347
    %v1441 = vunpack.c.l.b16 %v1348
    %v1442 = vunpack.c.h.b16 %v1348
    %v1443 = vunpack.c.l.b16 %v1349
    %v1444 = vunpack.c.h.b16 %v1349
    %v1445 = vunpack.c.l.b16 %v1350
    %v1446 = vunpack.c.h.b16 %v1350
    %v1447 = vunpack.c.l.b16 %v1351
    %v1448 = vunpack.c.h.b16 %v1351
    %v1449 = vunpack.c.l.b16 %v1352
    %v1450 = vunpack.c.h.b16 %v1352
    %v1451 = vunpack.c.l.b16 %v1353
    %v1452 = vunpack.c.h.b16 %v1353
    %v1453 = vunpack.c.l.b16 %v1354
    %v1454 = vunpack.c.h.b16 %v1354
    %v1455 = vunpack.c.l.b16 %v1355
    %v1456 = vunpack.c.h.b16 %v1355
    %v1457 = vunpack.c.l.b16 %v1356
    %v1458 = vunpack.c.h.b16 %v1356
    %v1459 = vunpack.c.l.b16 %v1357
    %v1460 = vunpack.c.h.b16 %v1357
    %v1461 = vunpack.c.l.b16 %v1358
    %v1462 = vunpack.c.h.b16 %v1358
    %v1463 = vunpack.c.l.b16 %v1359
    %v1464 = vunpack.c.h.b16 %v1359
    %v1465 = vunpack.c.l.b16 %v1360
    %v1466 = vunpack.c.h.b16 %v1360
    %v1467 = vunpack.c.l.b16 %v1361
    %v1468 = vunpack.c.h.b16 %v1361
    %v1469 = vunpack.c.l.b16 %v1362
    %v1470 = vunpack.c.h.b16 %v1362
    %v1471 = vpack.c.b16 %v1409, %v1407
    %v1472 = vpack.c.b16 %v1410, %v1408
    %v1473 = vpack.c.b16 %v1413, %v1411
    %v1474 = vpack.c.b16 %v1414, %v1412
    %v1475 = vpack.c.b16 %v1417, %v1415
    %v1476 = vpack.c.b16 %v1418, %v1416
    %v1477 = vpack.c.b16 %v1421, %v1419
    %v1478 = vpack.c.b16 %v1422, %v1420
    %v1479 = vpack.c.b16 %v1425, %v1423
    %v1480 = vpack.c.b16 %v1426, %v1424
    %v1481 = vpack.c.b16 %v1429, %v1427
    %v1482 = vpack.c.b16 %v1430, %v1428
    %v1483 = vpack.c.b16 %v1433, %v1431
    %v1484 = vpack.c.b16 %v1434, %v1432
    %v1485 = vpack.c.b16 %v1437, %v1435
    %v1486 = vpack.c.b16 %v1438, %v1436
    %v1487 = vpack.c.b16 %v1441, %v1439
    %v1488 = vpack.c.b16 %v1442, %v1440
    %v1489 = vpack.c.b16 %v1445, %v1443
    %v1490 = vpack.c.b16 %v1446, %v1444
    %v1491 = vpack.c.b16 %v1449, %v1447
    %v1492 = vpack.c.b16 %v1450, %v1448
    %v1493 = vpack.c.b16 %v1453, %v1451
    %v1494 = vpack.c.b16 %v1454, %v1452
    %v1495 = vpack.c.b16 %v1457, %v1455
    %v1496 = vpack.c.b16 %v1458, %v1456
    %v1497 = vpack.c.b16 %v1461, %v1459
    %v1498 = vpack.c.b16 %v1462, %v1460
    %v1499 = vpack.c.b16 %v1465, %v1463
    %v1500 = vpack.c.b16 %v1466, %v1464
    %v1501 = vpack.c.b16 %v1469, %v1467
    %v1502 = vpack.c.b16 %v1470, %v1468
    %1535 = vmatprep.subr.bf16.mxu0 %v1472
    %1536 = vmatpush1.bf16.msra.mxu0 %v1471
    %1537 = vmatprep.subr.bf16.mxu0 %v1474
    %1538 = vmatpush1.bf16.msra.mxu0 %v1473
    %1539 = vmatprep.subr.bf16.mxu0 %v1476
    %1540 = vmatpush1.bf16.msra.mxu0 %v1475
    %1541 = vmatprep.subr.bf16.mxu0 %v1478
    %1542 = vmatpush1.bf16.msra.mxu0 %v1477
    %1543 = vmatprep.subr.bf16.mxu0 %v1480
    %1544 = vmatpush1.bf16.msra.mxu0 %v1479
    %1545 = vmatprep.subr.bf16.mxu0 %v1482
    %1546 = vmatpush1.bf16.msra.mxu0 %v1481
    %1547 = vmatprep.subr.bf16.mxu0 %v1484
    %1548 = vmatpush1.bf16.msra.mxu0 %v1483
    %1549 = vmatprep.subr.bf16.mxu0 %v1486
    %1550 = vmatpush1.bf16.msra.mxu0 %v1485
    %1551 = vmatprep.subr.bf16.mxu0 %v1488
    %1552 = vmatpush1.bf16.msra.mxu0 %v1487
    %1553 = vmatprep.subr.bf16.mxu0 %v1490
    %1554 = vmatpush1.bf16.msra.mxu0 %v1489
    %1555 = vmatprep.subr.bf16.mxu0 %v1492
    %1556 = vmatpush1.bf16.msra.mxu0 %v1491
    %1557 = vmatprep.subr.bf16.mxu0 %v1494
    %1558 = vmatpush1.bf16.msra.mxu0 %v1493
    %1559 = vmatprep.subr.bf16.mxu0 %v1496
    %1560 = vmatpush1.bf16.msra.mxu0 %v1495
    %1561 = vmatprep.subr.bf16.mxu0 %v1498
    %1562 = vmatpush1.bf16.msra.mxu0 %v1497
    %1563 = vmatprep.subr.bf16.mxu0 %v1500
    %1564 = vmatpush1.bf16.msra.mxu0 %v1499
    %1565 = vmatprep.subr.bf16.mxu0 %v1502
    %1566 = vmatpush1.bf16.msra.mxu0 %v1501
    %1567 = vmatprep.mubr.bf16.mxu0 %v1330
    %1568 = vmatmul.mubr.bf16.gmra.mrb[0].mxu0 %v1329
    %v1569 = vpop.f32.mrb[0].mxu0
    %v1570 = vadd.f32 %v1368, %v1569
    %v1571 = vpop.f32.mrb[0].mxu0
    %v1572 = vadd.f32 %v1372, %v1571
    %v1573 = vpop.f32.mrb[0].mxu0
    %v1574 = vpop.f32.mrb[0].mxu0
    %1575 = vdwg.mxu0
    %v1576 = vmax.f32 %v1570, 0.0
    %v1577 = vmax.f32 %v1572, 0.0
    %v1578 = vpack.c.bf16 %v1576, %v1576
    %v1579 = vpack.c.bf16 %v1577, %v1577
    %v1580 = vld [vmem:[%s10] sm:$0xf]
    %v1581 = vld [vmem:[%s10 + $0x4] sm:$0xf]
    %v1582 = vld [vmem:[%s10 + $0x8] sm:$0xf]
    %v1583 = vld [vmem:[%s10 + $0xc] sm:$0xf]
    %v1584 = vld [vmem:[%s10 + $0x10] sm:$0xf]
    %v1585 = vld [vmem:[%s10 + $0x14] sm:$0xf]
    %v1586 = vld [vmem:[%s10 + $0x18] sm:$0xf]
    %v1587 = vld [vmem:[%s10 + $0x1c] sm:$0xf]
    %v1588 = vld [vmem:[%s10 + $0x20] sm:$0xf]
    %v1589 = vld [vmem:[%s10 + $0x24] sm:$0xf]
    %v1590 = vld [vmem:[%s10 + $0x28] sm:$0xf]
    %v1591 = vld [vmem:[%s10 + $0x2c] sm:$0xf]
    %v1592 = vld [vmem:[%s10 + $0x30] sm:$0xf]
    %v1593 = vld [vmem:[%s10 + $0x34] sm:$0xf]
    %v1594 = vld [vmem:[%s10 + $0x38] sm:$0xf]
    %v1595 = vld [vmem:[%s10 + $0x3c] sm:$0xf]
    %v1596 = vld [vmem:[%s10 + $0x40] sm:$0xf]
    %v1597 = vld [vmem:[%s10 + $0x44] sm:$0xf]
    %v1598 = vld [vmem:[%s10 + $0x48] sm:$0xf]
    %v1599 = vld [vmem:[%s10 + $0x4c] sm:$0xf]
    %v1600 = vld [vmem:[%s10 + $0x50] sm:$0xf]
    %v1601 = vld [vmem:[%s10 + $0x54] sm:$0xf]
    %v1602 = vld [vmem:[%s10 + $0x58] sm:$0xf]
    %v1603 = vld [vmem:[%s10 + $0x5c] sm:$0xf]
    %v1604 = vld [vmem:[%s10 + $0x60] sm:$0xf]
    %v1605 = vld [vmem:[%s10 + $0x64] sm:$0xf]
    %v1606 = vld [vmem:[%s10 + $0x68] sm:$0xf]
    %v1607 = vld [vmem:[%s10 + $0x6c] sm:$0xf]
    %v1608 = vld [vmem:[%s10 + $0x70] sm:$0xf]
    %v1609 = vld [vmem:[%s10 + $0x74] sm:$0xf]
    %v1610 = vld [vmem:[%s10 + $0x78] sm:$0xf]
    %v1611 = vld [vmem:[%s10 + $0x7c] sm:$0xf]
    %v1612 = vld [vmem:[%s11] sm:$0x1]
    %v1614 = vlaneseq
    %v1615 = vshrl.u32 %v1614, 7
    %v1616 = vsub.s32 0, %v1615
    %v1617 = vrot.slane %v1612, %v1616
    %v1651 = vunpack.c.l.b16 %v1580
    %v1652 = vunpack.c.l.b16 %v1581
    %v1653 = vunpack.c.l.b16 %v1582
    %v1654 = vunpack.c.l.b16 %v1583
    %v1655 = vunpack.c.l.b16 %v1584
    %v1656 = vunpack.c.l.b16 %v1585
    %v1657 = vunpack.c.l.b16 %v1586
    %v1658 = vunpack.c.l.b16 %v1587
    %v1659 = vunpack.c.l.b16 %v1588
    %v1660 = vunpack.c.l.b16 %v1589
    %v1661 = vunpack.c.l.b16 %v1590
    %v1662 = vunpack.c.l.b16 %v1591
    %v1663 = vunpack.c.l.b16 %v1592
    %v1664 = vunpack.c.l.b16 %v1593
    %v1665 = vunpack.c.l.b16 %v1594
    %v1666 = vunpack.c.l.b16 %v1595
    %v1667 = vunpack.c.l.b16 %v1596
    %v1668 = vunpack.c.l.b16 %v1597
    %v1669 = vunpack.c.l.b16 %v1598
    %v1670 = vunpack.c.l.b16 %v1599
    %v1671 = vunpack.c.l.b16 %v1600
    %v1672 = vunpack.c.l.b16 %v1601
    %v1673 = vunpack.c.l.b16 %v1602
    %v1674 = vunpack.c.l.b16 %v1603
    %v1675 = vunpack.c.l.b16 %v1604
    %v1676 = vunpack.c.l.b16 %v1605
    %v1677 = vunpack.c.l.b16 %v1606
    %v1678 = vunpack.c.l.b16 %v1607
    %v1679 = vunpack.c.l.b16 %v1608
    %v1680 = vunpack.c.l.b16 %v1609
    %v1681 = vunpack.c.l.b16 %v1610
    %v1682 = vunpack.c.l.b16 %v1611
    %v1683 = vpack.c.b16 %v1652, %v1651
    %v1684 = vpack.c.b16 %v1654, %v1653
    %v1685 = vpack.c.b16 %v1656, %v1655
    %v1686 = vpack.c.b16 %v1658, %v1657
    %v1687 = vpack.c.b16 %v1660, %v1659
    %v1688 = vpack.c.b16 %v1662, %v1661
    %v1689 = vpack.c.b16 %v1664, %v1663
    %v1690 = vpack.c.b16 %v1666, %v1665
    %v1691 = vpack.c.b16 %v1668, %v1667
    %v1692 = vpack.c.b16 %v1670, %v1669
    %v1693 = vpack.c.b16 %v1672, %v1671
    %v1694 = vpack.c.b16 %v1674, %v1673
    %v1695 = vpack.c.b16 %v1676, %v1675
    %v1696 = vpack.c.b16 %v1678, %v1677
    %v1697 = vpack.c.b16 %v1680, %v1679
    %v1698 = vpack.c.b16 %v1682, %v1681
    %1715 = vmatprep.subr.bf16.mxu0 0
    %1716 = vmatpush1.bf16.msra.mxu0 %v1683
    %1717 = vmatprep.subr.bf16.mxu0 0
    %1718 = vmatpush1.bf16.msra.mxu0 %v1684
    %1719 = vmatprep.subr.bf16.mxu0 0
    %1720 = vmatpush1.bf16.msra.mxu0 %v1685
    %1721 = vmatprep.subr.bf16.mxu0 0
    %1722 = vmatpush1.bf16.msra.mxu0 %v1686
    %1723 = vmatprep.subr.bf16.mxu0 0
    %1724 = vmatpush1.bf16.msra.mxu0 %v1687
    %1725 = vmatprep.subr.bf16.mxu0 0
    %1726 = vmatpush1.bf16.msra.mxu0 %v1688
    %1727 = vmatprep.subr.bf16.mxu0 0
    %1728 = vmatpush1.bf16.msra.mxu0 %v1689
    %1729 = vmatprep.subr.bf16.mxu0 0
    %1730 = vmatpush1.bf16.msra.mxu0 %v1690
    %1731 = vmatprep.subr.bf16.mxu0 0
    %1732 = vmatpush1.bf16.msra.mxu0 %v1691
    %1733 = vmatprep.subr.bf16.mxu0 0
    %1734 = vmatpush1.bf16.msra.mxu0 %v1692
    %1735 = vmatprep.subr.bf16.mxu0 0
    %1736 = vmatpush1.bf16.msra.mxu0 %v1693
    %1737 = vmatprep.subr.bf16.mxu0 0
    %1738 = vmatpush1.bf16.msra.mxu0 %v1694
    %1739 = vmatprep.subr.bf16.mxu0 0
    %1740 = vmatpush1.bf16.msra.mxu0 %v1695
    %1741 = vmatprep.subr.bf16.mxu0 0
    %1742 = vmatpush1.bf16.msra.mxu0 %v1696
    %1743 = vmatprep.subr.bf16.mxu0 0
    %1744 = vmatpush1.bf16.msra.mxu0 %v1697
    %1745 = vmatprep.subr.bf16.mxu0 0
    %1746 = vmatpush1.bf16.msra.mxu0 %v1698
    %1747 = vmatprep.mubr.bf16.mxu0 %v1579
    %1748 = vmatmul.mubr.bf16.gmra.mrb[0].mxu0 %v1578
    %v1749 = vpop.f32.mrb[0].mxu0
    %v1750 = vadd.f32 %v1617, %v1749
    %v1751 = vpop.f32.mrb[0].mxu0
    %v1752 = vpop.f32.mrb[0].mxu0
    %v1753 = vpop.f32.mrb[0].mxu0
    %1754 = vdwg.mxu0
    %v1755 = vlaneseq
    %v1756 = vand.u32 %v1755, 127
    %vm1757 = vcmp.lt.s32.totalorder %v1756, 18
    %v1758 = vsel %vm1757, %v1750, -1e+30
    %1759 = vmax.xlane.f32.xlu0 %v1758
    %v1760 = vpop.xlane.xlu0 %1759
    %v1761 = vsub.f32 %v1758, %v1760
    %v1762 = vmul.f32 %v1761, 1.442695
    %v1763 = vpow.pop %v1762
    %1764 = vadd.xlane.f32.xlu0 %v1763
    %v1765 = vpop.xlane.xlu0 %1764
    %v1766 = vrcp.pop %v1765
    %v1767 = vmul.f32 %v1763, %v1766
    %v1768 = vlog2.pop %v1765
    %v1769 = vmul.f32 %v1768, 0.6931472
    %v1770 = vsub.f32 %v1761, %v1769
    %v1771 = vmul.f32 %v1767, %v1770
    %v1772 = vsel %vm1757, %v1771, 0.0
    %1773 = vadd.xlane.f32.xlu0 %v1772
    %v1774 = vpop.xlane.xlu0 %1773
    %v1775 = vsub.f32 0.0, %v1774
    %v1776 = vld [vmem:[%s2] sm:$0xff]
    %v1777 = vadd.f32 %v1770, %v1776
    %v1778 = vsel %vm1757, %v1777, -1e+30
    %1779 = vmax.xlane.f32.xlu0 %v1778
    %v1780 = vpop.xlane.xlu0 %1779
    %vm1781 = vcmp.eq.f32.partialorder %v1778, %v1780
    %v1782 = vsel %vm1781, %v1756, 128
    %v1783 = vand.u32 %v1782, 65535
    %v1784 = vshra.s32 %v1782, 16
    %v1785 = vcvt.s32.f32 %v1783
    %v1786 = vcvt.s32.f32 %v1784
    %1787 = vmin.xlane.f32.xlu0 %v1786
    %v1788 = vpop.xlane.xlu0 %1787
    %vm1789 = vcmp.eq.f32.partialorder %v1786, %v1788
    %v1790 = vsel %vm1789, %v1785, inf
    %1791 = vmin.xlane.f32.xlu0 %v1790
    %v1792 = vpop.xlane.xlu0 %1791
    %v1793 = vcvt.f32.s32 %v1792
    %v1794 = vcvt.f32.s32 %v1788
    %v1795 = vshll.u32 %v1794, 16
    %v1796 = vadd.s32 %v1795, %v1793
    %vm1797 = vcmp.eq.s32.totalorder %v1756, %v1796
    %v1798 = vsel %vm1797, %v1770, 0.0
    %1799 = vadd.xlane.f32.xlu0 %v1798
    %v1800 = vpop.xlane.xlu0 %1799
    %vm1801 = vcmp.eq.s32.totalorder %v1756, 0
    %v1802 = vcvt.s32.f32 %v1796
    %vm1803 = vcmp.eq.s32.totalorder %v1756, 1
    %vm1804 = vcmp.eq.s32.totalorder %v1756, 2
    %v1805 = vsel %vm1804, %v1775, 0.0
    %v1806 = vsel %vm1803, %v1800, %v1805
    %v1807 = vsel %vm1801, %v1802, %v1806
    %1808 = vst [vmem:[%s12] sm:$0xff] %v1807
    // Predicated region
    $region66: #{recurrent_actor_rollout.1} parent=1 // pred_check
      _
    $region67: #{recurrent_actor_rollout.1} parent=1 // pred_check_branch
      %1810 = sbr.rel (0) target = $region69
    $region68: #{recurrent_actor_rollout.1} parent=1 // pred_region
      _
    $region69: #{recurrent_actor_rollout.1} parent=1 // pred_fallthru
      _
    // Predicated region
    $region70: #{recurrent_actor_rollout.1} parent=1 // pred_check
      _
    $region71: #{recurrent_actor_rollout.1} parent=1 // pred_check_branch
      %1812 = sbr.rel (0) target = $region73
    $region72: #{recurrent_actor_rollout.1} parent=1 // pred_region
      %s1814 = ssub.s32 256, 256
      %1815 = vsyncadd [#allocation6], %s1814
      %s1817 = sshll.u32 [#allocation12], 4
      %s1818 = int_to_ptr.vmem [resolvable:$true] %s1817
      %1820 = dma.vmem_to_hbm [thread:$0]  %s1818, 256, %s13, [#allocation6]
    $region73: #{recurrent_actor_rollout.1} parent=1 // pred_fallthru
      _
    // Predicated region
    $region74: #{recurrent_actor_rollout.1} parent=1 // pred_check
      _
    $region75: #{recurrent_actor_rollout.1} parent=1 // pred_check_branch
      %1822 = sbr.rel (0) target = $region77
    $region76: #{recurrent_actor_rollout.1} parent=1 // pred_region
      _
    $region77: #{recurrent_actor_rollout.1} parent=1 // pred_fallthru
      _
    // Predicated region
    $region78: #{recurrent_actor_rollout.1} parent=1 // pred_check
      _
    $region79: #{recurrent_actor_rollout.1} parent=1 // pred_check_branch
      %1824 = sbr.rel (0) target = $region81
    $region80: #{recurrent_actor_rollout.1} parent=1 // pred_region
      %1825 = dma.done [#allocation6], 256
    $region81: #{recurrent_actor_rollout.1} parent=1 // pred_fallthru
      _
    %1826 = vsyncpa [#allocation5], 1
    %1827 = vsyncpa [#allocation8], 1
    %1828 = vsyncpa [#allocation11], 1
    %1829 = vsyncpa [#allocation6], 1

</llo_original>
